<compile_context>
chip_gen: v5e
topology: v5e:2x2
jax: 0.10.0
libtpu: 0.0.40
codegen_flags: <defaults>
</compile_context>

<pallas_src>
import functools

import jax
import jax.numpy as jnp
from jax.experimental import pallas as pl
from jax.experimental.pallas import tpu as pltpu

# ----------------------------------------------------------------------------
# Scaled-down, hardware-friendly ESM-1b stand-in hyper-parameters
# (real model: 33 layers, 1280 dim, 20 heads, ffn 5120, vocab 33).
# ----------------------------------------------------------------------------
VOCAB = 33
E = 128          # embedding dim (lane-dense)
H = 4            # attention heads
D = E // H       # head dim = 32
FFN = 256        # feed-forward hidden dim (lane multiple)
LAYERS = 3       # stand-in for the 33 ESM layers
MAX_POS = 64     # learned positional-embedding table size


# ----------------------------------------------------------------------------
# Fused transformer kernel: one grid step == one transformer layer.
# The activation x stays resident in VMEM scratch across the whole grid.
# ----------------------------------------------------------------------------
def _layer_norm(x, g, b, eps=1e-5):
    mu = jnp.mean(x, axis=-1, keepdims=True)
    var = jnp.mean((x - mu) ** 2, axis=-1, keepdims=True)
    return (x - mu) * jax.lax.rsqrt(var + eps) * g + b


def _esm_stack_kernel(x0_ref, gln_ref, lnaux_ref, wqkv_ref, bqkv_ref,
                      wo_ref, w1_ref, b1_ref, w2_ref,
                      o_ref, x_scr, *, n_tokens):
    """One pre-LN transformer layer per grid step; x carried in x_scr.

    Refs (per grid step, leading layer axis squeezed out):
      x0_ref    (T_pad, E)   embedded tokens (token + positional embedding)
      gln_ref   (4, E)       rows: [emb_ln_g, emb_ln_b, final_ln_g, final_ln_b]
      lnaux_ref (6, E)       rows: [ln1_g, ln1_b, ln2_g, ln2_b, bo, b2]
      wqkv_ref  (E, 3E)      fused Q/K/V projection
      bqkv_ref  (1, 3E)
      wo_ref    (E, E)       attention output projection
      w1_ref    (E, FFN), b1_ref (1, FFN), w2_ref (FFN, E)
      o_ref     (T_pad, E)   final-LN representation (written at last layer)
      x_scr     (T_pad, E)   VMEM-resident activation carry
    """
    layer = pl.program_id(0)

    @pl.when(layer == 0)
    def _():
        # emb_layer_norm_before
        x_scr[...] = _layer_norm(x0_ref[...], gln_ref[0:1, :], gln_ref[1:2, :])

    x = x_scr[...]
    t_pad = x.shape[0]

    # ---------------- pre-LN multi-head self-attention --------------------
    h = _layer_norm(x, lnaux_ref[0:1, :], lnaux_ref[1:2, :])
    qkv = jnp.dot(h, wqkv_ref[...], preferred_element_type=jnp.float32)
    qkv = qkv + bqkv_ref[...]
    q = qkv[:, 0:E]
    k = qkv[:, E:2 * E]
    v = qkv[:, 2 * E:3 * E]

    # key-padding mask: columns >= n_tokens are padding rows and must not
    # receive attention weight.
    key_idx = jax.lax.broadcasted_iota(jnp.int32, (t_pad, t_pad), 1)
    key_valid = key_idx < n_tokens

    scale = 1.0 / (D ** 0.5)
    head_outs = []
    for hh in range(H):                      # unrolled head split (lane slices)
        qh = q[:, hh * D:(hh + 1) * D] * scale
        kh = k[:, hh * D:(hh + 1) * D]
        vh = v[:, hh * D:(hh + 1) * D]
        s = jnp.einsum("td,sd->ts", qh, kh,
                       preferred_element_type=jnp.float32)        # (T_pad, T_pad)
        s = jnp.where(key_valid, s, -1e30)
        m = jnp.max(s, axis=-1, keepdims=True)
        p = jnp.exp(s - m)
        denom = jnp.sum(p, axis=-1, keepdims=True)
        p = p * pl.reciprocal(denom, approx=True)
        head_outs.append(jnp.dot(p, vh, preferred_element_type=jnp.float32))
    attn = jnp.concatenate(head_outs, axis=-1)                    # (T_pad, E)

    # output projection + residual, fused into the same kernel
    x = x + jnp.dot(attn, wo_ref[...], preferred_element_type=jnp.float32) \
          + lnaux_ref[4:5, :]

    # ---------------- pre-LN feed-forward ----------------------------------
    h = _layer_norm(x, lnaux_ref[2:3, :], lnaux_ref[3:4, :])
    h = jnp.dot(h, w1_ref[...], preferred_element_type=jnp.float32) + b1_ref[...]
    # TODO(synk): ESM-1b uses exact erf GELU; tanh approximation used here.
    h = jax.nn.gelu(h, approximate=True)
    x = x + jnp.dot(h, w2_ref[...], preferred_element_type=jnp.float32) \
          + lnaux_ref[5:6, :]

    x_scr[...] = x

    @pl.when(layer == pl.num_programs(0) - 1)
    def _():
        # emb_layer_norm_after == representations[REPR_LAYER_NUM]
        o_ref[...] = _layer_norm(x, gln_ref[2:3, :], gln_ref[3:4, :])


def esm_embedder_forward(params, tokens, *, n_tokens, max_seq_len):
    """Mirrors EsmEmbedder.forward semantics on a padded token sequence."""
    t_pad = tokens.shape[0]
    # Embedding-table gather + learned positional embedding (XLA glue).
    x0 = params["tok_emb"][tokens] + params["pos_emb"][:t_pad]

    kernel = functools.partial(_esm_stack_kernel, n_tokens=n_tokens)

    reps = pl.pallas_call(
        kernel,
        out_shape=jax.ShapeDtypeStruct((t_pad, E), jnp.float32),
        grid=(LAYERS,),
        in_specs=[
            pl.BlockSpec((t_pad, E), lambda l: (0, 0)),            # x0
            pl.BlockSpec((4, E), lambda l: (0, 0)),                # global LN vecs
            pl.BlockSpec((None, 6, E), lambda l: (l, 0, 0)),       # per-layer LN/bias
            pl.BlockSpec((None, E, 3 * E), lambda l: (l, 0, 0)),   # wqkv
            pl.BlockSpec((None, 1, 3 * E), lambda l: (l, 0, 0)),   # bqkv
            pl.BlockSpec((None, E, E), lambda l: (l, 0, 0)),       # wo
            pl.BlockSpec((None, E, FFN), lambda l: (l, 0, 0)),     # w1
            pl.BlockSpec((None, 1, FFN), lambda l: (l, 0, 0)),     # b1
            pl.BlockSpec((None, FFN, E), lambda l: (l, 0, 0)),     # w2
        ],
        out_specs=pl.BlockSpec((t_pad, E), lambda l: (0, 0)),
        scratch_shapes=[pltpu.VMEM((t_pad, E), jnp.float32)],
        compiler_params=pltpu.CompilerParams(
            dimension_semantics=("arbitrary",)),                   # carried layer axis
    )(x0, params["global_ln"], params["ln_aux"], params["wqkv"],
      params["bqkv"], params["wo"], params["w1"], params["b1"], params["w2"])

    # batch dim + drop CLS / EOS / padding, like
    # results['representations'][33][..., 1:max_seq_len+1, :]
    return reps[None, 1:max_seq_len + 1, :]


# ----------------------------------------------------------------------------
# Parameters (deterministic, synthetic — NOT a checkpoint load)
# ----------------------------------------------------------------------------
def init_params(key):
    keys = jax.random.split(key, 6)

    def dense(k, shape, fan_in):
        return (jax.random.normal(k, shape, jnp.float32)
                * (1.0 / jnp.sqrt(fan_in)))

    ones = jnp.ones((E,), jnp.float32)
    zeros = jnp.zeros((E,), jnp.float32)
    # rows: [emb_ln_g, emb_ln_b, final_ln_g, final_ln_b]
    global_ln = jnp.stack([ones, zeros, ones, zeros])
    # rows: [ln1_g, ln1_b, ln2_g, ln2_b, bo, b2]
    ln_aux = jnp.tile(jnp.stack([ones, zeros, ones, zeros, zeros, zeros])[None],
                      (LAYERS, 1, 1))

    return {
        "tok_emb": jax.random.normal(keys[0], (VOCAB, E), jnp.float32) * 0.02,
        "pos_emb": jax.random.normal(keys[1], (MAX_POS, E), jnp.float32) * 0.02,
        "global_ln": global_ln,
        "ln_aux": ln_aux,
        "wqkv": dense(keys[2], (LAYERS, E, 3 * E), E),
        "bqkv": jnp.zeros((LAYERS, 1, 3 * E), jnp.float32),
        "wo": dense(keys[3], (LAYERS, E, E), E),
        "w1": dense(keys[4], (LAYERS, E, FFN), E),
        "b1": jnp.zeros((LAYERS, 1, FFN), jnp.float32),
        "w2": dense(keys[5], (LAYERS, FFN, E), FFN),
    }


# ----------------------------------------------------------------------------
# Tokenizer (deterministic stand-in for esm alphabet.get_batch_converter)
# ----------------------------------------------------------------------------
_AA_ORDER = "LAGVSERTIDPKQNFYMHWC"
_CLS, _PAD, _EOS, _UNK = 0, 1, 2, 3
_AA_TO_TOK = {aa: i + 4 for i, aa in enumerate(_AA_ORDER)}


def tokenize(aa_seq, t_pad):
    ids = [_CLS] + [_AA_TO_TOK.get(c, _UNK) for c in aa_seq] + [_EOS]
    n_tokens = len(ids)
    ids = ids + [_PAD] * (t_pad - n_tokens)      # pad to sublane multiple of 8
    return jnp.asarray(ids, dtype=jnp.int32), n_tokens


# ----------------------------------------------------------------------------
# Main
# ----------------------------------------------------------------------------
if __name__ == "__main__":
    aa_seq = "MKTAYIAK"                    # small example sequence, len 8
    max_seq_len = len(aa_seq)
    n_real = max_seq_len + 2               # <cls> + residues + <eos> = 10
    t_pad = ((n_real + 7) // 8) * 8        # 16 (sublane-aligned)
    tokens, n_tokens = tokenize(aa_seq, t_pad)

    key = jax.random.PRNGKey(0)
    params = init_params(key)

    fwd = jax.jit(functools.partial(esm_embedder_forward,
                                    n_tokens=n_tokens,
                                    max_seq_len=max_seq_len))
    out = fwd(params, tokens)
    out = jax.block_until_ready(out)

    assert out.shape == (1, max_seq_len, E), out.shape
    assert out.dtype == jnp.float32
    assert bool(jnp.all(jnp.isfinite(out)))
    print("KERNEL_OK")
</pallas_src>

<mosaic_0001>
module attributes {stable_mosaic.version = 11 : i64} {
  func.func @_esm_stack_kernel(%arg0: i32, %arg1: memref<16x128xf32, #tpu.memory_space<vmem>>, %arg2: memref<4x128xf32, #tpu.memory_space<vmem>>, %arg3: memref<1x6x128xf32, #tpu.memory_space<vmem>>, %arg4: memref<1x128x384xf32, #tpu.memory_space<vmem>>, %arg5: memref<1x1x384xf32, #tpu.memory_space<vmem>>, %arg6: memref<1x128x128xf32, #tpu.memory_space<vmem>>, %arg7: memref<1x128x256xf32, #tpu.memory_space<vmem>>, %arg8: memref<1x1x256xf32, #tpu.memory_space<vmem>>, %arg9: memref<1x256x128xf32, #tpu.memory_space<vmem>>, %arg10: memref<16x128xf32, #tpu.memory_space<vmem>>, %arg11: memref<16x128xf32, #tpu.memory_space<vmem>>) attributes {dimension_semantics = [#tpu.dimension_semantics<arbitrary>], iteration_bounds = array<i64: 3>, scalar_prefetch = 0 : i64, scratch_operands = 1 : i64, tpu.core_type = #tpu.core_type<tc>, window_params = [{pipeline_mode = #tpu.pipeline_mode<synchronous>, transform_indices = @transform_0, window_bounds = array<i64: 16, 128>}, {pipeline_mode = #tpu.pipeline_mode<synchronous>, transform_indices = @transform_1, window_bounds = array<i64: 4, 128>}, {transform_indices = @transform_2, window_bounds = array<i64: 1, 6, 128>}, {transform_indices = @transform_3, window_bounds = array<i64: 1, 128, 384>}, {transform_indices = @transform_4, window_bounds = array<i64: 1, 1, 384>}, {transform_indices = @transform_5, window_bounds = array<i64: 1, 128, 128>}, {transform_indices = @transform_6, window_bounds = array<i64: 1, 128, 256>}, {transform_indices = @transform_7, window_bounds = array<i64: 1, 1, 256>}, {transform_indices = @transform_8, window_bounds = array<i64: 1, 256, 128>}, {pipeline_mode = #tpu.pipeline_mode<synchronous>, transform_indices = @transform_9, window_bounds = array<i64: 16, 128>}]} {
    %c0_i32 = arith.constant 0 : i32
    %0 = arith.cmpi eq, %arg0, %c0_i32 : i32
    %1 = arith.extui %0 : i1 to i32
    %c0_i32_0 = arith.constant 0 : i32
    %2 = arith.cmpi ne, %1, %c0_i32_0 : i32
    scf.if %2 {
      %c0_77 = arith.constant 0 : index
      %c0_78 = arith.constant 0 : index
      %186 = vector.load %arg1[%c0_77, %c0_78] : memref<16x128xf32, #tpu.memory_space<vmem>>, vector<16x128xf32>
      %c0_79 = arith.constant 0 : index
      %c0_80 = arith.constant 0 : index
      %187 = vector.load %arg2[%c0_79, %c0_80] : memref<4x128xf32, #tpu.memory_space<vmem>>, vector<1x128xf32>
      %c1_81 = arith.constant 1 : index
      %c0_82 = arith.constant 0 : index
      %188 = vector.load %arg2[%c1_81, %c0_82] : memref<4x128xf32, #tpu.memory_space<vmem>>, vector<1x128xf32>
      %cst_83 = arith.constant dense<0.000000e+00> : vector<16xf32>
      %189 = vector.multi_reduction <add>, %186, %cst_83 [1] : vector<16x128xf32> to vector<16xf32>
      %190 = vector.shape_cast %189 : vector<16xf32> to vector<16x1xf32>
      %cst_84 = arith.constant 1.280000e+02 : f32
      %191 = vector.broadcast %cst_84 : f32 to vector<16x1xf32>
      %192 = arith.divf %190, %191 : vector<16x1xf32>
      %193 = vector.broadcast %192 : vector<16x1xf32> to vector<16x128xf32>
      %194 = arith.subf %186, %193 : vector<16x128xf32>
      %195 = arith.mulf %194, %194 : vector<16x128xf32>
      %cst_85 = arith.constant dense<0.000000e+00> : vector<16xf32>
      %196 = vector.multi_reduction <add>, %195, %cst_85 [1] : vector<16x128xf32> to vector<16xf32>
      %197 = vector.shape_cast %196 : vector<16xf32> to vector<16x1xf32>
      %cst_86 = arith.constant 1.280000e+02 : f32
      %198 = vector.broadcast %cst_86 : f32 to vector<16x1xf32>
      %199 = arith.divf %197, %198 : vector<16x1xf32>
      %200 = vector.broadcast %192 : vector<16x1xf32> to vector<16x128xf32>
      %201 = arith.subf %186, %200 : vector<16x128xf32>
      %cst_87 = arith.constant 9.99999974E-6 : f32
      %202 = vector.broadcast %cst_87 : f32 to vector<16x1xf32>
      %203 = arith.addf %199, %202 : vector<16x1xf32>
      %204 = math.rsqrt %203 : vector<16x1xf32>
      %205 = vector.broadcast %204 : vector<16x1xf32> to vector<16x128xf32>
      %206 = arith.mulf %201, %205 : vector<16x128xf32>
      %207 = vector.broadcast %187 : vector<1x128xf32> to vector<16x128xf32>
      %208 = arith.mulf %206, %207 : vector<16x128xf32>
      %209 = vector.broadcast %188 : vector<1x128xf32> to vector<16x128xf32>
      %210 = arith.addf %208, %209 : vector<16x128xf32>
      %c0_88 = arith.constant 0 : index
      %c0_89 = arith.constant 0 : index
      %211 = vector.load %arg11[%c0_88, %c0_89] : memref<16x128xf32, #tpu.memory_space<vmem>>, vector<16x128xf32>
      tpu.vector_store %arg11[%c0_88, %c0_89], %210 {strides = array<i32>} : memref<16x128xf32, #tpu.memory_space<vmem>>, vector<16x128xf32>,
    } else {
    }
    %c0 = arith.constant 0 : index
    %c0_1 = arith.constant 0 : index
    %3 = vector.load %arg11[%c0, %c0_1] : memref<16x128xf32, #tpu.memory_space<vmem>>, vector<16x128xf32>
    %c0_2 = arith.constant 0 : index
    %c0_3 = arith.constant 0 : index
    %c0_4 = arith.constant 0 : index
    %4 = vector.load %arg3[%c0_2, %c0_3, %c0_4] : memref<1x6x128xf32, #tpu.memory_space<vmem>>, vector<1x1x128xf32>
    %5 = vector.shape_cast %4 : vector<1x1x128xf32> to vector<1x128xf32>
    %c0_5 = arith.constant 0 : index
    %c1 = arith.constant 1 : index
    %c0_6 = arith.constant 0 : index
    %6 = vector.load %arg3[%c0_5, %c1, %c0_6] : memref<1x6x128xf32, #tpu.memory_space<vmem>>, vector<1x1x128xf32>
    %7 = vector.shape_cast %6 : vector<1x1x128xf32> to vector<1x128xf32>
    %cst = arith.constant dense<0.000000e+00> : vector<16xf32>
    %8 = vector.multi_reduction <add>, %3, %cst [1] : vector<16x128xf32> to vector<16xf32>
    %9 = vector.shape_cast %8 : vector<16xf32> to vector<16x1xf32>
    %cst_7 = arith.constant 1.280000e+02 : f32
    %10 = vector.broadcast %cst_7 : f32 to vector<16x1xf32>
    %11 = arith.divf %9, %10 : vector<16x1xf32>
    %12 = vector.broadcast %11 : vector<16x1xf32> to vector<16x128xf32>
    %13 = arith.subf %3, %12 : vector<16x128xf32>
    %14 = arith.mulf %13, %13 : vector<16x128xf32>
    %cst_8 = arith.constant dense<0.000000e+00> : vector<16xf32>
    %15 = vector.multi_reduction <add>, %14, %cst_8 [1] : vector<16x128xf32> to vector<16xf32>
    %16 = vector.shape_cast %15 : vector<16xf32> to vector<16x1xf32>
    %cst_9 = arith.constant 1.280000e+02 : f32
    %17 = vector.broadcast %cst_9 : f32 to vector<16x1xf32>
    %18 = arith.divf %16, %17 : vector<16x1xf32>
    %19 = vector.broadcast %11 : vector<16x1xf32> to vector<16x128xf32>
    %20 = arith.subf %3, %19 : vector<16x128xf32>
    %cst_10 = arith.constant 9.99999974E-6 : f32
    %21 = vector.broadcast %cst_10 : f32 to vector<16x1xf32>
    %22 = arith.addf %18, %21 : vector<16x1xf32>
    %23 = math.rsqrt %22 : vector<16x1xf32>
    %24 = vector.broadcast %23 : vector<16x1xf32> to vector<16x128xf32>
    %25 = arith.mulf %20, %24 : vector<16x128xf32>
    %26 = vector.broadcast %5 : vector<1x128xf32> to vector<16x128xf32>
    %27 = arith.mulf %25, %26 : vector<16x128xf32>
    %28 = vector.broadcast %7 : vector<1x128xf32> to vector<16x128xf32>
    %29 = arith.addf %27, %28 : vector<16x128xf32>
    %c0_11 = arith.constant 0 : index
    %c0_12 = arith.constant 0 : index
    %c0_13 = arith.constant 0 : index
    %30 = vector.load %arg4[%c0_11, %c0_12, %c0_13] : memref<1x128x384xf32, #tpu.memory_space<vmem>>, vector<1x128x384xf32>
    %31 = vector.shape_cast %30 : vector<1x128x384xf32> to vector<128x384xf32>
    %cst_14 = arith.constant dense<0.000000e+00> : vector<16x384xf32>
    %32 = tpu.matmul %29, %31, %cst_14 {dimension_numbers = #tpu.dot_dimension_numbers<[1], [0], [0], [1], [0, 0, 1, 1], [], []>} : vector<16x128xf32>, vector<128x384xf32>, vector<16x384xf32> -> vector<16x384xf32>
    %c0_15 = arith.constant 0 : index
    %c0_16 = arith.constant 0 : index
    %c0_17 = arith.constant 0 : index
    %33 = vector.load %arg5[%c0_15, %c0_16, %c0_17] : memref<1x1x384xf32, #tpu.memory_space<vmem>>, vector<1x1x384xf32>
    %34 = vector.shape_cast %33 : vector<1x1x384xf32> to vector<1x384xf32>
    %35 = vector.broadcast %34 : vector<1x384xf32> to vector<16x384xf32>
    %36 = arith.addf %32, %35 : vector<16x384xf32>
    %37 = vector.extract_strided_slice %36 {offsets = [0, 0], sizes = [16, 128], strides = [1, 1]} : vector<16x384xf32> to vector<16x128xf32>
    %38 = vector.extract_strided_slice %36 {offsets = [0, 128], sizes = [16, 128], strides = [1, 1]} : vector<16x384xf32> to vector<16x128xf32>
    %39 = vector.extract_strided_slice %36 {offsets = [0, 256], sizes = [16, 128], strides = [1, 1]} : vector<16x384xf32> to vector<16x128xf32>
    %40 = tpu.iota {dimensions = array<i32: 1>} : vector<16x16xi32>
    %c10_i32 = arith.constant 10 : i32
    %41 = vector.broadcast %c10_i32 : i32 to vector<16x16xi32>
    %42 = arith.cmpi slt, %40, %41 : vector<16x16xi32>
    %43 = vector.extract_strided_slice %37 {offsets = [0, 0], sizes = [16, 32], strides = [1, 1]} : vector<16x128xf32> to vector<16x32xf32>
    %cst_18 = arith.constant 0.176776692 : f32
    %44 = vector.broadcast %cst_18 : f32 to vector<16x32xf32>
    %45 = arith.mulf %43, %44 : vector<16x32xf32>
    %46 = vector.extract_strided_slice %38 {offsets = [0, 0], sizes = [16, 32], strides = [1, 1]} : vector<16x128xf32> to vector<16x32xf32>
    %47 = vector.extract_strided_slice %39 {offsets = [0, 0], sizes = [16, 32], strides = [1, 1]} : vector<16x128xf32> to vector<16x32xf32>
    "tpu.trace_start"() <{level = 10 : i32, message = "td,sd->ts"}> : () -> ()
    %cst_19 = arith.constant dense<0.000000e+00> : vector<16x16xf32>
    %48 = tpu.matmul %45, %46, %cst_19 {dimension_numbers = #tpu.dot_dimension_numbers<[1], [1], [0], [0], [0, 0, 1, 0], [], []>} : vector<16x32xf32>, vector<16x32xf32>, vector<16x16xf32> -> vector<16x16xf32>
    %cst_20 = arith.constant -1.000000e+30 : f32
    "tpu.trace_stop"() : () -> ()
    %49 = vector.broadcast %cst_20 : f32 to vector<16x16xf32>
    %50 = arith.select %42, %48, %49 : vector<16x16xi1>, vector<16x16xf32>
    %cst_21 = arith.constant dense<0xFF800000> : vector<16xf32>
    %51 = vector.multi_reduction <maximumf>, %50, %cst_21 [1] : vector<16x16xf32> to vector<16xf32>
    %52 = vector.shape_cast %51 : vector<16xf32> to vector<16x1xf32>
    %53 = vector.broadcast %52 : vector<16x1xf32> to vector<16x16xf32>
    %54 = arith.subf %50, %53 : vector<16x16xf32>
    %55 = math.exp %54 : vector<16x16xf32>
    %cst_22 = arith.constant dense<0.000000e+00> : vector<16xf32>
    %56 = vector.multi_reduction <add>, %55, %cst_22 [1] : vector<16x16xf32> to vector<16xf32>
    %57 = vector.shape_cast %56 : vector<16xf32> to vector<16x1xf32>
    %58 = tpu.reciprocal %57 {approx = true} : vector<16x1xf32> -> vector<16x1xf32>
    %59 = vector.broadcast %58 : vector<16x1xf32> to vector<16x16xf32>
    %60 = arith.mulf %55, %59 : vector<16x16xf32>
    %cst_23 = arith.constant dense<0.000000e+00> : vector<16x32xf32>
    %61 = tpu.matmul %60, %47, %cst_23 {dimension_numbers = #tpu.dot_dimension_numbers<[1], [0], [0], [1], [0, 0, 1, 1], [], []>} : vector<16x16xf32>, vector<16x32xf32>, vector<16x32xf32> -> vector<16x32xf32>
    %62 = vector.extract_strided_slice %37 {offsets = [0, 32], sizes = [16, 32], strides = [1, 1]} : vector<16x128xf32> to vector<16x32xf32>
    %cst_24 = arith.constant 0.176776692 : f32
    %63 = vector.broadcast %cst_24 : f32 to vector<16x32xf32>
    %64 = arith.mulf %62, %63 : vector<16x32xf32>
    %65 = vector.extract_strided_slice %38 {offsets = [0, 32], sizes = [16, 32], strides = [1, 1]} : vector<16x128xf32> to vector<16x32xf32>
    %66 = vector.extract_strided_slice %39 {offsets = [0, 32], sizes = [16, 32], strides = [1, 1]} : vector<16x128xf32> to vector<16x32xf32>
    "tpu.trace_start"() <{level = 10 : i32, message = "td,sd->ts"}> : () -> ()
    %cst_25 = arith.constant dense<0.000000e+00> : vector<16x16xf32>
    %67 = tpu.matmul %64, %65, %cst_25 {dimension_numbers = #tpu.dot_dimension_numbers<[1], [1], [0], [0], [0, 0, 1, 0], [], []>} : vector<16x32xf32>, vector<16x32xf32>, vector<16x16xf32> -> vector<16x16xf32>
    %cst_26 = arith.constant -1.000000e+30 : f32
    "tpu.trace_stop"() : () -> ()
    %68 = vector.broadcast %cst_26 : f32 to vector<16x16xf32>
    %69 = arith.select %42, %67, %68 : vector<16x16xi1>, vector<16x16xf32>
    %cst_27 = arith.constant dense<0xFF800000> : vector<16xf32>
    %70 = vector.multi_reduction <maximumf>, %69, %cst_27 [1] : vector<16x16xf32> to vector<16xf32>
    %71 = vector.shape_cast %70 : vector<16xf32> to vector<16x1xf32>
    %72 = vector.broadcast %71 : vector<16x1xf32> to vector<16x16xf32>
    %73 = arith.subf %69, %72 : vector<16x16xf32>
    %74 = math.exp %73 : vector<16x16xf32>
    %cst_28 = arith.constant dense<0.000000e+00> : vector<16xf32>
    %75 = vector.multi_reduction <add>, %74, %cst_28 [1] : vector<16x16xf32> to vector<16xf32>
    %76 = vector.shape_cast %75 : vector<16xf32> to vector<16x1xf32>
    %77 = tpu.reciprocal %76 {approx = true} : vector<16x1xf32> -> vector<16x1xf32>
    %78 = vector.broadcast %77 : vector<16x1xf32> to vector<16x16xf32>
    %79 = arith.mulf %74, %78 : vector<16x16xf32>
    %cst_29 = arith.constant dense<0.000000e+00> : vector<16x32xf32>
    %80 = tpu.matmul %79, %66, %cst_29 {dimension_numbers = #tpu.dot_dimension_numbers<[1], [0], [0], [1], [0, 0, 1, 1], [], []>} : vector<16x16xf32>, vector<16x32xf32>, vector<16x32xf32> -> vector<16x32xf32>
    %81 = vector.extract_strided_slice %37 {offsets = [0, 64], sizes = [16, 32], strides = [1, 1]} : vector<16x128xf32> to vector<16x32xf32>
    %cst_30 = arith.constant 0.176776692 : f32
    %82 = vector.broadcast %cst_30 : f32 to vector<16x32xf32>
    %83 = arith.mulf %81, %82 : vector<16x32xf32>
    %84 = vector.extract_strided_slice %38 {offsets = [0, 64], sizes = [16, 32], strides = [1, 1]} : vector<16x128xf32> to vector<16x32xf32>
    %85 = vector.extract_strided_slice %39 {offsets = [0, 64], sizes = [16, 32], strides = [1, 1]} : vector<16x128xf32> to vector<16x32xf32>
    "tpu.trace_start"() <{level = 10 : i32, message = "td,sd->ts"}> : () -> ()
    %cst_31 = arith.constant dense<0.000000e+00> : vector<16x16xf32>
    %86 = tpu.matmul %83, %84, %cst_31 {dimension_numbers = #tpu.dot_dimension_numbers<[1], [1], [0], [0], [0, 0, 1, 0], [], []>} : vector<16x32xf32>, vector<16x32xf32>, vector<16x16xf32> -> vector<16x16xf32>
    %cst_32 = arith.constant -1.000000e+30 : f32
    "tpu.trace_stop"() : () -> ()
    %87 = vector.broadcast %cst_32 : f32 to vector<16x16xf32>
    %88 = arith.select %42, %86, %87 : vector<16x16xi1>, vector<16x16xf32>
    %cst_33 = arith.constant dense<0xFF800000> : vector<16xf32>
    %89 = vector.multi_reduction <maximumf>, %88, %cst_33 [1] : vector<16x16xf32> to vector<16xf32>
    %90 = vector.shape_cast %89 : vector<16xf32> to vector<16x1xf32>
    %91 = vector.broadcast %90 : vector<16x1xf32> to vector<16x16xf32>
    %92 = arith.subf %88, %91 : vector<16x16xf32>
    %93 = math.exp %92 : vector<16x16xf32>
    %cst_34 = arith.constant dense<0.000000e+00> : vector<16xf32>
    %94 = vector.multi_reduction <add>, %93, %cst_34 [1] : vector<16x16xf32> to vector<16xf32>
    %95 = vector.shape_cast %94 : vector<16xf32> to vector<16x1xf32>
    %96 = tpu.reciprocal %95 {approx = true} : vector<16x1xf32> -> vector<16x1xf32>
    %97 = vector.broadcast %96 : vector<16x1xf32> to vector<16x16xf32>
    %98 = arith.mulf %93, %97 : vector<16x16xf32>
    %cst_35 = arith.constant dense<0.000000e+00> : vector<16x32xf32>
    %99 = tpu.matmul %98, %85, %cst_35 {dimension_numbers = #tpu.dot_dimension_numbers<[1], [0], [0], [1], [0, 0, 1, 1], [], []>} : vector<16x16xf32>, vector<16x32xf32>, vector<16x32xf32> -> vector<16x32xf32>
    %100 = vector.extract_strided_slice %37 {offsets = [0, 96], sizes = [16, 32], strides = [1, 1]} : vector<16x128xf32> to vector<16x32xf32>
    %cst_36 = arith.constant 0.176776692 : f32
    %101 = vector.broadcast %cst_36 : f32 to vector<16x32xf32>
    %102 = arith.mulf %100, %101 : vector<16x32xf32>
    %103 = vector.extract_strided_slice %38 {offsets = [0, 96], sizes = [16, 32], strides = [1, 1]} : vector<16x128xf32> to vector<16x32xf32>
    %104 = vector.extract_strided_slice %39 {offsets = [0, 96], sizes = [16, 32], strides = [1, 1]} : vector<16x128xf32> to vector<16x32xf32>
    "tpu.trace_start"() <{level = 10 : i32, message = "td,sd->ts"}> : () -> ()
    %cst_37 = arith.constant dense<0.000000e+00> : vector<16x16xf32>
    %105 = tpu.matmul %102, %103, %cst_37 {dimension_numbers = #tpu.dot_dimension_numbers<[1], [1], [0], [0], [0, 0, 1, 0], [], []>} : vector<16x32xf32>, vector<16x32xf32>, vector<16x16xf32> -> vector<16x16xf32>
    %cst_38 = arith.constant -1.000000e+30 : f32
    "tpu.trace_stop"() : () -> ()
    %106 = vector.broadcast %cst_38 : f32 to vector<16x16xf32>
    %107 = arith.select %42, %105, %106 : vector<16x16xi1>, vector<16x16xf32>
    %cst_39 = arith.constant dense<0xFF800000> : vector<16xf32>
    %108 = vector.multi_reduction <maximumf>, %107, %cst_39 [1] : vector<16x16xf32> to vector<16xf32>
    %109 = vector.shape_cast %108 : vector<16xf32> to vector<16x1xf32>
    %110 = vector.broadcast %109 : vector<16x1xf32> to vector<16x16xf32>
    %111 = arith.subf %107, %110 : vector<16x16xf32>
    %112 = math.exp %111 : vector<16x16xf32>
    %cst_40 = arith.constant dense<0.000000e+00> : vector<16xf32>
    %113 = vector.multi_reduction <add>, %112, %cst_40 [1] : vector<16x16xf32> to vector<16xf32>
    %114 = vector.shape_cast %113 : vector<16xf32> to vector<16x1xf32>
    %115 = tpu.reciprocal %114 {approx = true} : vector<16x1xf32> -> vector<16x1xf32>
    %116 = vector.broadcast %115 : vector<16x1xf32> to vector<16x16xf32>
    %117 = arith.mulf %112, %116 : vector<16x16xf32>
    %cst_41 = arith.constant dense<0.000000e+00> : vector<16x32xf32>
    %118 = tpu.matmul %117, %104, %cst_41 {dimension_numbers = #tpu.dot_dimension_numbers<[1], [0], [0], [1], [0, 0, 1, 1], [], []>} : vector<16x16xf32>, vector<16x32xf32>, vector<16x32xf32> -> vector<16x32xf32>
    %119 = tpu.concatenate %61, %80, %99, %118 in 1 : vector<16x32xf32>, vector<16x32xf32>, vector<16x32xf32>, vector<16x32xf32> -> vector<16x128xf32>
    %c0_42 = arith.constant 0 : index
    %c0_43 = arith.constant 0 : index
    %c0_44 = arith.constant 0 : index
    %120 = vector.load %arg6[%c0_42, %c0_43, %c0_44] : memref<1x128x128xf32, #tpu.memory_space<vmem>>, vector<1x128x128xf32>
    %121 = vector.shape_cast %120 : vector<1x128x128xf32> to vector<128x128xf32>
    %cst_45 = arith.constant dense<0.000000e+00> : vector<16x128xf32>
    %122 = tpu.matmul %119, %121, %cst_45 {dimension_numbers = #tpu.dot_dimension_numbers<[1], [0], [0], [1], [0, 0, 1, 1], [], []>} : vector<16x128xf32>, vector<128x128xf32>, vector<16x128xf32> -> vector<16x128xf32>
    %123 = arith.addf %3, %122 : vector<16x128xf32>
    %c0_46 = arith.constant 0 : index
    %c4 = arith.constant 4 : index
    %c0_47 = arith.constant 0 : index
    %124 = vector.load %arg3[%c0_46, %c4, %c0_47] : memref<1x6x128xf32, #tpu.memory_space<vmem>>, vector<1x1x128xf32>
    %125 = vector.shape_cast %124 : vector<1x1x128xf32> to vector<1x128xf32>
    %126 = vector.broadcast %125 : vector<1x128xf32> to vector<16x128xf32>
    %127 = arith.addf %123, %126 : vector<16x128xf32>
    %c0_48 = arith.constant 0 : index
    %c2 = arith.constant 2 : index
    %c0_49 = arith.constant 0 : index
    %128 = vector.load %arg3[%c0_48, %c2, %c0_49] : memref<1x6x128xf32, #tpu.memory_space<vmem>>, vector<1x1x128xf32>
    %129 = vector.shape_cast %128 : vector<1x1x128xf32> to vector<1x128xf32>
    %c0_50 = arith.constant 0 : index
    %c3 = arith.constant 3 : index
    %c0_51 = arith.constant 0 : index
    %130 = vector.load %arg3[%c0_50, %c3, %c0_51] : memref<1x6x128xf32, #tpu.memory_space<vmem>>, vector<1x1x128xf32>
    %131 = vector.shape_cast %130 : vector<1x1x128xf32> to vector<1x128xf32>
    %cst_52 = arith.constant dense<0.000000e+00> : vector<16xf32>
    %132 = vector.multi_reduction <add>, %127, %cst_52 [1] : vector<16x128xf32> to vector<16xf32>
    %133 = vector.shape_cast %132 : vector<16xf32> to vector<16x1xf32>
    %cst_53 = arith.constant 1.280000e+02 : f32
    %134 = vector.broadcast %cst_53 : f32 to vector<16x1xf32>
    %135 = arith.divf %133, %134 : vector<16x1xf32>
    %136 = vector.broadcast %135 : vector<16x1xf32> to vector<16x128xf32>
    %137 = arith.subf %127, %136 : vector<16x128xf32>
    %138 = arith.mulf %137, %137 : vector<16x128xf32>
    %cst_54 = arith.constant dense<0.000000e+00> : vector<16xf32>
    %139 = vector.multi_reduction <add>, %138, %cst_54 [1] : vector<16x128xf32> to vector<16xf32>
    %140 = vector.shape_cast %139 : vector<16xf32> to vector<16x1xf32>
    %cst_55 = arith.constant 1.280000e+02 : f32
    %141 = vector.broadcast %cst_55 : f32 to vector<16x1xf32>
    %142 = arith.divf %140, %141 : vector<16x1xf32>
    %143 = vector.broadcast %135 : vector<16x1xf32> to vector<16x128xf32>
    %144 = arith.subf %127, %143 : vector<16x128xf32>
    %cst_56 = arith.constant 9.99999974E-6 : f32
    %145 = vector.broadcast %cst_56 : f32 to vector<16x1xf32>
    %146 = arith.addf %142, %145 : vector<16x1xf32>
    %147 = math.rsqrt %146 : vector<16x1xf32>
    %148 = vector.broadcast %147 : vector<16x1xf32> to vector<16x128xf32>
    %149 = arith.mulf %144, %148 : vector<16x128xf32>
    %150 = vector.broadcast %129 : vector<1x128xf32> to vector<16x128xf32>
    %151 = arith.mulf %149, %150 : vector<16x128xf32>
    %152 = vector.broadcast %131 : vector<1x128xf32> to vector<16x128xf32>
    %153 = arith.addf %151, %152 : vector<16x128xf32>
    %c0_57 = arith.constant 0 : index
    %c0_58 = arith.constant 0 : index
    %c0_59 = arith.constant 0 : index
    %154 = vector.load %arg7[%c0_57, %c0_58, %c0_59] : memref<1x128x256xf32, #tpu.memory_space<vmem>>, vector<1x128x256xf32>
    %155 = vector.shape_cast %154 : vector<1x128x256xf32> to vector<128x256xf32>
    %cst_60 = arith.constant dense<0.000000e+00> : vector<16x256xf32>
    %156 = tpu.matmul %153, %155, %cst_60 {dimension_numbers = #tpu.dot_dimension_numbers<[1], [0], [0], [1], [0, 0, 1, 1], [], []>} : vector<16x128xf32>, vector<128x256xf32>, vector<16x256xf32> -> vector<16x256xf32>
    %c0_61 = arith.constant 0 : index
    %c0_62 = arith.constant 0 : index
    %c0_63 = arith.constant 0 : index
    %157 = vector.load %arg8[%c0_61, %c0_62, %c0_63] : memref<1x1x256xf32, #tpu.memory_space<vmem>>, vector<1x1x256xf32>
    %158 = vector.shape_cast %157 : vector<1x1x256xf32> to vector<1x256xf32>
    %159 = vector.broadcast %158 : vector<1x256xf32> to vector<16x256xf32>
    %160 = arith.addf %156, %159 : vector<16x256xf32>
    %161 = arith.mulf %160, %160 : vector<16x256xf32>
    %162 = arith.mulf %160, %161 : vector<16x256xf32>
    %cst_64 = arith.constant 4.471500e-02 : f32
    %163 = vector.broadcast %cst_64 : f32 to vector<16x256xf32>
    %164 = arith.mulf %163, %162 : vector<16x256xf32>
    %165 = arith.addf %160, %164 : vector<16x256xf32>
    %cst_65 = arith.constant 0.797884583 : f32
    %166 = vector.broadcast %cst_65 : f32 to vector<16x256xf32>
    %167 = arith.mulf %166, %165 : vector<16x256xf32>
    %168 = math.tanh %167 : vector<16x256xf32>
    %cst_66 = arith.constant 1.000000e+00 : f32
    %169 = vector.broadcast %cst_66 : f32 to vector<16x256xf32>
    %170 = arith.addf %169, %168 : vector<16x256xf32>
    %cst_67 = arith.constant 5.000000e-01 : f32
    %171 = vector.broadcast %cst_67 : f32 to vector<16x256xf32>
    %172 = arith.mulf %171, %170 : vector<16x256xf32>
    %173 = arith.mulf %160, %172 : vector<16x256xf32>
    %c0_68 = arith.constant 0 : index
    %c0_69 = arith.constant 0 : index
    %c0_70 = arith.constant 0 : index
    %174 = vector.load %arg9[%c0_68, %c0_69, %c0_70] : memref<1x256x128xf32, #tpu.memory_space<vmem>>, vector<1x256x128xf32>
    %175 = vector.shape_cast %174 : vector<1x256x128xf32> to vector<256x128xf32>
    %cst_71 = arith.constant dense<0.000000e+00> : vector<16x128xf32>
    %176 = tpu.matmul %173, %175, %cst_71 {dimension_numbers = #tpu.dot_dimension_numbers<[1], [0], [0], [1], [0, 0, 1, 1], [], []>} : vector<16x256xf32>, vector<256x128xf32>, vector<16x128xf32> -> vector<16x128xf32>
    %177 = arith.addf %127, %176 : vector<16x128xf32>
    %c0_72 = arith.constant 0 : index
    %c5 = arith.constant 5 : index
    %c0_73 = arith.constant 0 : index
    %178 = vector.load %arg3[%c0_72, %c5, %c0_73] : memref<1x6x128xf32, #tpu.memory_space<vmem>>, vector<1x1x128xf32>
    %179 = vector.shape_cast %178 : vector<1x1x128xf32> to vector<1x128xf32>
    %180 = vector.broadcast %179 : vector<1x128xf32> to vector<16x128xf32>
    %181 = arith.addf %177, %180 : vector<16x128xf32>
    %c0_74 = arith.constant 0 : index
    %c0_75 = arith.constant 0 : index
    %182 = vector.load %arg11[%c0_74, %c0_75] : memref<16x128xf32, #tpu.memory_space<vmem>>, vector<16x128xf32>
    tpu.vector_store %arg11[%c0_74, %c0_75], %181 {strides = array<i32>} : memref<16x128xf32, #tpu.memory_space<vmem>>, vector<16x128xf32>,
    %c2_i32 = arith.constant 2 : i32
    %183 = arith.cmpi eq, %arg0, %c2_i32 : i32
    %184 = arith.extui %183 : i1 to i32
    %c0_i32_76 = arith.constant 0 : i32
    %185 = arith.cmpi ne, %184, %c0_i32_76 : i32
    scf.if %185 {
      %c2_77 = arith.constant 2 : index
      %c0_78 = arith.constant 0 : index
      %186 = vector.load %arg2[%c2_77, %c0_78] : memref<4x128xf32, #tpu.memory_space<vmem>>, vector<1x128xf32>
      %c3_79 = arith.constant 3 : index
      %c0_80 = arith.constant 0 : index
      %187 = vector.load %arg2[%c3_79, %c0_80] : memref<4x128xf32, #tpu.memory_space<vmem>>, vector<1x128xf32>
      %cst_81 = arith.constant dense<0.000000e+00> : vector<16xf32>
      %188 = vector.multi_reduction <add>, %181, %cst_81 [1] : vector<16x128xf32> to vector<16xf32>
      %189 = vector.shape_cast %188 : vector<16xf32> to vector<16x1xf32>
      %cst_82 = arith.constant 1.280000e+02 : f32
      %190 = vector.broadcast %cst_82 : f32 to vector<16x1xf32>
      %191 = arith.divf %189, %190 : vector<16x1xf32>
      %192 = vector.broadcast %191 : vector<16x1xf32> to vector<16x128xf32>
      %193 = arith.subf %181, %192 : vector<16x128xf32>
      %194 = arith.mulf %193, %193 : vector<16x128xf32>
      %cst_83 = arith.constant dense<0.000000e+00> : vector<16xf32>
      %195 = vector.multi_reduction <add>, %194, %cst_83 [1] : vector<16x128xf32> to vector<16xf32>
      %196 = vector.shape_cast %195 : vector<16xf32> to vector<16x1xf32>
      %cst_84 = arith.constant 1.280000e+02 : f32
      %197 = vector.broadcast %cst_84 : f32 to vector<16x1xf32>
      %198 = arith.divf %196, %197 : vector<16x1xf32>
      %199 = vector.broadcast %191 : vector<16x1xf32> to vector<16x128xf32>
      %200 = arith.subf %181, %199 : vector<16x128xf32>
      %cst_85 = arith.constant 9.99999974E-6 : f32
      %201 = vector.broadcast %cst_85 : f32 to vector<16x1xf32>
      %202 = arith.addf %198, %201 : vector<16x1xf32>
      %203 = math.rsqrt %202 : vector<16x1xf32>
      %204 = vector.broadcast %203 : vector<16x1xf32> to vector<16x128xf32>
      %205 = arith.mulf %200, %204 : vector<16x128xf32>
      %206 = vector.broadcast %186 : vector<1x128xf32> to vector<16x128xf32>
      %207 = arith.mulf %205, %206 : vector<16x128xf32>
      %208 = vector.broadcast %187 : vector<1x128xf32> to vector<16x128xf32>
      %209 = arith.addf %207, %208 : vector<16x128xf32>
      %c0_86 = arith.constant 0 : index
      %c0_87 = arith.constant 0 : index
      %210 = vector.load %arg10[%c0_86, %c0_87] : memref<16x128xf32, #tpu.memory_space<vmem>>, vector<16x128xf32>
      tpu.vector_store %arg10[%c0_86, %c0_87], %209 {strides = array<i32>} : memref<16x128xf32, #tpu.memory_space<vmem>>, vector<16x128xf32>,
    } else {
    }
    return
  }
  func.func @transform_0(%arg0: i32) -> (i32, i32) {
    %c0_i32 = arith.constant 0 : i32
    %c0_i32_0 = arith.constant 0 : i32
    %c0_i32_1 = arith.constant 0 : i32
    return %c0_i32, %c0_i32_0 : i32, i32
  }
  func.func @transform_1(%arg0: i32) -> (i32, i32) {
    %c0_i32 = arith.constant 0 : i32
    %c0_i32_0 = arith.constant 0 : i32
    %c0_i32_1 = arith.constant 0 : i32
    return %c0_i32, %c0_i32_0 : i32, i32
  }
  func.func @transform_2(%arg0: i32) -> (i32, i32, i32) {
    %c0_i32 = arith.constant 0 : i32
    %c0_i32_0 = arith.constant 0 : i32
    %c0_i32_1 = arith.constant 0 : i32
    return %arg0, %c0_i32, %c0_i32_0 : i32, i32, i32
  }
  func.func @transform_3(%arg0: i32) -> (i32, i32, i32) {
    %c0_i32 = arith.constant 0 : i32
    %c0_i32_0 = arith.constant 0 : i32
    %c0_i32_1 = arith.constant 0 : i32
    return %arg0, %c0_i32, %c0_i32_0 : i32, i32, i32
  }
  func.func @transform_4(%arg0: i32) -> (i32, i32, i32) {
    %c0_i32 = arith.constant 0 : i32
    %c0_i32_0 = arith.constant 0 : i32
    %c0_i32_1 = arith.constant 0 : i32
    return %arg0, %c0_i32, %c0_i32_0 : i32, i32, i32
  }
  func.func @transform_5(%arg0: i32) -> (i32, i32, i32) {
    %c0_i32 = arith.constant 0 : i32
    %c0_i32_0 = arith.constant 0 : i32
    %c0_i32_1 = arith.constant 0 : i32
    return %arg0, %c0_i32, %c0_i32_0 : i32, i32, i32
  }
  func.func @transform_6(%arg0: i32) -> (i32, i32, i32) {
    %c0_i32 = arith.constant 0 : i32
    %c0_i32_0 = arith.constant 0 : i32
    %c0_i32_1 = arith.constant 0 : i32
    return %arg0, %c0_i32, %c0_i32_0 : i32, i32, i32
  }
  func.func @transform_7(%arg0: i32) -> (i32, i32, i32) {
    %c0_i32 = arith.constant 0 : i32
    %c0_i32_0 = arith.constant 0 : i32
    %c0_i32_1 = arith.constant 0 : i32
    return %arg0, %c0_i32, %c0_i32_0 : i32, i32, i32
  }
  func.func @transform_8(%arg0: i32) -> (i32, i32, i32) {
    %c0_i32 = arith.constant 0 : i32
    %c0_i32_0 = arith.constant 0 : i32
    %c0_i32_1 = arith.constant 0 : i32
    return %arg0, %c0_i32, %c0_i32_0 : i32, i32, i32
  }
  func.func @transform_9(%arg0: i32) -> (i32, i32) {
    %c0_i32 = arith.constant 0 : i32
    %c0_i32_0 = arith.constant 0 : i32
    %c0_i32_1 = arith.constant 0 : i32
    return %c0_i32, %c0_i32_0 : i32, i32
  }
}

</mosaic_0001>

<llo_original>
// kernel: esm_embedder_forward.1
$region0: #{esm_embedder_forward.1}
  #allocation0 [shape = 'u32[]', space=smem, size = 0x4, offset = 0x4, fixed_abs, tag = 'smem constant byte address 0x4 - core index']
  #allocation1 [shape = 'u32[72,128]{1,0:T(1,128)}', space=vmem, size = 0x9000, scoped, tag = 'internal scratch']
  #allocation2 [shape = 'f32[16,128]{1,0:T(8,128)}', space=vmem, size = 0x2000, scoped, tag = 'scratch operand']
  %s0 = inlined_call_operand.vmem [shape: f32[16,128], index: 0, kind: input, shape index: {}]
  %s1 = inlined_call_operand.vmem [shape: f32[4,128], index: 1, kind: input, shape index: {}]
  %s2 = inlined_call_operand.vmem [shape: f32[3,6,128], index: 2, kind: input, shape index: {}]
  %s3 = inlined_call_operand.hbm [shape: f32[3,128,384], index: 3, kind: input, shape index: {}]
  %s4 = inlined_call_operand.vmem [shape: f32[3,1,384], index: 4, kind: input, shape index: {}]
  %s5 = inlined_call_operand.hbm [shape: f32[3,128,128], index: 5, kind: input, shape index: {}]
  %s6 = inlined_call_operand.hbm [shape: f32[3,128,256], index: 6, kind: input, shape index: {}]
  %s7 = inlined_call_operand.vmem [shape: f32[3,1,256], index: 7, kind: input, shape index: {}]
  %s8 = inlined_call_operand.hbm [shape: f32[3,256,128], index: 8, kind: input, shape index: {}]
  %s9 = inlined_call_operand.vmem [shape: f32[16,128], index: 9, kind: output, shape index: {}]
  %s10 = sld [smem:[#allocation0]]
  $region93: #{esm_embedder_forward.1} parent=0
    _
  %s12 = ssub.s32 1, %s10
  %s13 = scalar_select 0, %s12, %s10
  $region1: #{esm_embedder_forward.1} parent=0
    #allocation3 [shape = 'u8[393216]{0}', space=vmem, size = 0x60000, scoped, tag = 'input window, operand 3']
    #allocation4 [shape = 's32[2]{0}', space=sflag, size = 0x8, scoped, tag = 'scoped memory for esm_embedder_forward.1']
    #allocation5 [shape = 'u8[131072]{0}', space=vmem, size = 0x20000, scoped, tag = 'input window, operand 5']
    #allocation6 [shape = 's32[2]{0}', space=sflag, size = 0x8, scoped, tag = 'scoped memory for esm_embedder_forward.1']
    #allocation7 [shape = 'u8[262144]{0}', space=vmem, size = 0x40000, scoped, tag = 'input window, operand 6']
    #allocation8 [shape = 'u8[262144]{0}', space=vmem, size = 0x40000, scoped, tag = 'input window, operand 8']
    #allocation9 [shape = 's32[2]{0}', space=sflag, size = 0x8, scoped, tag = 'scoped memory for esm_embedder_forward.1']
    %14 = vsyncpa [#allocation4], 0
    %s15 = scalar_lea.sflag [#allocation4], 1
    %16 = vsyncpa %s15, 0
    %17 = vsyncpa [#allocation6], 0
    %s18 = scalar_lea.sflag [#allocation6], 1
    %19 = vsyncpa %s18, 0
    %20 = vsyncpa [#allocation9], 0
    %s21 = scalar_lea.sflag [#allocation9], 1
    %22 = vsyncpa %s21, 0
    loop: start=0, step=1, limit=5
    $region2: #{esm_embedder_forward.1} parent=1 // loop_pre_header
      _
    $region3: #{esm_embedder_forward.1} parent=1 // loop_header
      %s24 = sphi 0, %s28
      %p25 = scmp.ge.s32.totalorder %s24, 5
      %s32 = sphi 0, %s32
      %s34 = sphi 0, %s32
      %s35 = sphi 0, %s34
      %s49 = sphi 0, %s35
      %s53 = sphi 0, %s53
      %s55 = sphi 0, %s53
      %s56 = sphi 0, %s55
      %s70 = sphi 0, %s56
      %s76 = sphi 0, %s78
      %s79 = sphi 0, %s76
      %s80 = sphi 0, %s79
      %s96 = sphi 0, %s80
      %s102 = sphi 0, %s104
      %s105 = sphi 0, %s102
      %s106 = sphi 0, %s105
      %s122 = sphi 0, %s106
      %s128 = sphi 0, %s130
      %s131 = sphi 0, %s128
      %s132 = sphi 0, %s131
      %s148 = sphi 0, %s132
      %s154 = sphi 0, %s156
      %s157 = sphi 0, %s154
      %s158 = sphi 0, %s157
      %s174 = sphi 0, %s158
      %s180 = sphi 0, %s182
      %s183 = sphi 0, %s180
      %s184 = sphi 0, %s183
      %s200 = sphi 0, %s184
      %s206 = sphi 0, %s208
      %s209 = sphi 0, %s206
      %s210 = sphi 0, %s209
      %s226 = sphi 0, %s210
      %s232 = sphi 0, %s234
      %s235 = sphi 0, %s232
      %s236 = sphi 0, %s235
      %s252 = sphi 0, %s236
      %s256 = sphi 0, %s256
      %s258 = sphi 0, %s256
      %s259 = sphi 0, %s258
      %s273 = sphi 0, %s259
    $region4: #{esm_embedder_forward.1} parent=1 // loop_header_branch
      %27 = sbr.rel (%p25) target = $region8
    $region5: #{esm_embedder_forward.1} parent=1 // loop_body
      %s29 = ssub.s32 %s24, 1
      %s30 = ssub.s32 %s24, 2
      %s31 = sadd.s32 %s24, 1
      %s33 = sadd.s32 %s32, 1
      %p36 = scmp.eq.s32.totalorder %s24, 2
      %p37 = scmp.ne.s32.totalorder %s32, %s34
      %p38 = scmp.eq.s32.totalorder %s24, 0
      %p39 = por %p37, %p38
      %p40 = scmp.ne.s32.totalorder %s32, %s34
      %p41 = scmp.eq.s32.totalorder %s29, 2
      %p42 = por %p40, %p41
      %p43 = scmp.ne.s32.totalorder %s34, %s35
      %p44 = scmp.eq.s32.totalorder %s29, 0
      %p45 = por %p43, %p44
      %p46 = scmp.ne.s32.totalorder %s34, %s35
      %p47 = scmp.eq.s32.totalorder %s30, 2
      %p48 = por %p46, %p47
      %p50 = scmp.ne.s32.totalorder %s35, %s49
      %p51 = scmp.eq.s32.totalorder %s30, 0
      %p52 = por %p50, %p51
      %s54 = sadd.s32 %s53, 1
      %p57 = scmp.eq.s32.totalorder %s24, 2
      %p58 = scmp.ne.s32.totalorder %s53, %s55
      %p59 = scmp.eq.s32.totalorder %s24, 0
      %p60 = por %p58, %p59
      %p61 = scmp.ne.s32.totalorder %s53, %s55
      %p62 = scmp.eq.s32.totalorder %s29, 2
      %p63 = por %p61, %p62
      %p64 = scmp.ne.s32.totalorder %s55, %s56
      %p65 = scmp.eq.s32.totalorder %s29, 0
      %p66 = por %p64, %p65
      %p67 = scmp.ne.s32.totalorder %s55, %s56
      %p68 = scmp.eq.s32.totalorder %s30, 2
      %p69 = por %p67, %p68
      %p71 = scmp.ne.s32.totalorder %s56, %s70
      %p72 = scmp.eq.s32.totalorder %s30, 0
      %p73 = por %p71, %p72
      %s74 = ssub.s32 %s24, %s31
      %p75 = scmp.eq.s32.totalorder %s74, 0
      %s77 = sadd.s32 %s76, 1
      %s78 = scalar_select %p75, %s76, %s77
      %p81 = pneg %p75
      %p82 = scmp.eq.s32.totalorder %s24, 2
      %p83 = por %p81, %p82
      %p84 = scmp.ne.s32.totalorder %s76, %s79
      %p85 = scmp.eq.s32.totalorder %s24, 0
      %p86 = por %p84, %p85
      %p87 = scmp.ne.s32.totalorder %s76, %s79
      %p88 = scmp.eq.s32.totalorder %s29, 2
      %p89 = por %p87, %p88
      %p90 = scmp.ne.s32.totalorder %s79, %s80
      %p91 = scmp.eq.s32.totalorder %s29, 0
      %p92 = por %p90, %p91
      %p93 = scmp.ne.s32.totalorder %s79, %s80
      %p94 = scmp.eq.s32.totalorder %s30, 2
      %p95 = por %p93, %p94
      %p97 = scmp.ne.s32.totalorder %s80, %s96
      %p98 = scmp.eq.s32.totalorder %s30, 0
      %p99 = por %p97, %p98
      %s100 = ssub.s32 %s24, %s31
      %p101 = scmp.eq.s32.totalorder %s100, 0
      %s103 = sadd.s32 %s102, 1
      %s104 = scalar_select %p101, %s102, %s103
      %p107 = pneg %p101
      %p108 = scmp.eq.s32.totalorder %s24, 2
      %p109 = por %p107, %p108
      %p110 = scmp.ne.s32.totalorder %s102, %s105
      %p111 = scmp.eq.s32.totalorder %s24, 0
      %p112 = por %p110, %p111
      %p113 = scmp.ne.s32.totalorder %s102, %s105
      %p114 = scmp.eq.s32.totalorder %s29, 2
      %p115 = por %p113, %p114
      %p116 = scmp.ne.s32.totalorder %s105, %s106
      %p117 = scmp.eq.s32.totalorder %s29, 0
      %p118 = por %p116, %p117
      %p119 = scmp.ne.s32.totalorder %s105, %s106
      %p120 = scmp.eq.s32.totalorder %s30, 2
      %p121 = por %p119, %p120
      %p123 = scmp.ne.s32.totalorder %s106, %s122
      %p124 = scmp.eq.s32.totalorder %s30, 0
      %p125 = por %p123, %p124
      %s126 = ssub.s32 %s24, %s31
      %p127 = scmp.eq.s32.totalorder %s126, 0
      %s129 = sadd.s32 %s128, 1
      %s130 = scalar_select %p127, %s128, %s129
      %p133 = pneg %p127
      %p134 = scmp.eq.s32.totalorder %s24, 2
      %p135 = por %p133, %p134
      %p136 = scmp.ne.s32.totalorder %s128, %s131
      %p137 = scmp.eq.s32.totalorder %s24, 0
      %p138 = por %p136, %p137
      %p139 = scmp.ne.s32.totalorder %s128, %s131
      %p140 = scmp.eq.s32.totalorder %s29, 2
      %p141 = por %p139, %p140
      %p142 = scmp.ne.s32.totalorder %s131, %s132
      %p143 = scmp.eq.s32.totalorder %s29, 0
      %p144 = por %p142, %p143
      %p145 = scmp.ne.s32.totalorder %s131, %s132
      %p146 = scmp.eq.s32.totalorder %s30, 2
      %p147 = por %p145, %p146
      %p149 = scmp.ne.s32.totalorder %s132, %s148
      %p150 = scmp.eq.s32.totalorder %s30, 0
      %p151 = por %p149, %p150
      %s152 = ssub.s32 %s24, %s31
      %p153 = scmp.eq.s32.totalorder %s152, 0
      %s155 = sadd.s32 %s154, 1
      %s156 = scalar_select %p153, %s154, %s155
      %p159 = pneg %p153
      %p160 = scmp.eq.s32.totalorder %s24, 2
      %p161 = por %p159, %p160
      %p162 = scmp.ne.s32.totalorder %s154, %s157
      %p163 = scmp.eq.s32.totalorder %s24, 0
      %p164 = por %p162, %p163
      %p165 = scmp.ne.s32.totalorder %s154, %s157
      %p166 = scmp.eq.s32.totalorder %s29, 2
      %p167 = por %p165, %p166
      %p168 = scmp.ne.s32.totalorder %s157, %s158
      %p169 = scmp.eq.s32.totalorder %s29, 0
      %p170 = por %p168, %p169
      %p171 = scmp.ne.s32.totalorder %s157, %s158
      %p172 = scmp.eq.s32.totalorder %s30, 2
      %p173 = por %p171, %p172
      %p175 = scmp.ne.s32.totalorder %s158, %s174
      %p176 = scmp.eq.s32.totalorder %s30, 0
      %p177 = por %p175, %p176
      %s178 = ssub.s32 %s24, %s31
      %p179 = scmp.eq.s32.totalorder %s178, 0
      %s181 = sadd.s32 %s180, 1
      %s182 = scalar_select %p179, %s180, %s181
      %p185 = pneg %p179
      %p186 = scmp.eq.s32.totalorder %s24, 2
      %p187 = por %p185, %p186
      %p188 = scmp.ne.s32.totalorder %s180, %s183
      %p189 = scmp.eq.s32.totalorder %s24, 0
      %p190 = por %p188, %p189
      %p191 = scmp.ne.s32.totalorder %s180, %s183
      %p192 = scmp.eq.s32.totalorder %s29, 2
      %p193 = por %p191, %p192
      %p194 = scmp.ne.s32.totalorder %s183, %s184
      %p195 = scmp.eq.s32.totalorder %s29, 0
      %p196 = por %p194, %p195
      %p197 = scmp.ne.s32.totalorder %s183, %s184
      %p198 = scmp.eq.s32.totalorder %s30, 2
      %p199 = por %p197, %p198
      %p201 = scmp.ne.s32.totalorder %s184, %s200
      %p202 = scmp.eq.s32.totalorder %s30, 0
      %p203 = por %p201, %p202
      %s204 = ssub.s32 %s24, %s31
      %p205 = scmp.eq.s32.totalorder %s204, 0
      %s207 = sadd.s32 %s206, 1
      %s208 = scalar_select %p205, %s206, %s207
      %p211 = pneg %p205
      %p212 = scmp.eq.s32.totalorder %s24, 2
      %p213 = por %p211, %p212
      %p214 = scmp.ne.s32.totalorder %s206, %s209
      %p215 = scmp.eq.s32.totalorder %s24, 0
      %p216 = por %p214, %p215
      %p217 = scmp.ne.s32.totalorder %s206, %s209
      %p218 = scmp.eq.s32.totalorder %s29, 2
      %p219 = por %p217, %p218
      %p220 = scmp.ne.s32.totalorder %s209, %s210
      %p221 = scmp.eq.s32.totalorder %s29, 0
      %p222 = por %p220, %p221
      %p223 = scmp.ne.s32.totalorder %s209, %s210
      %p224 = scmp.eq.s32.totalorder %s30, 2
      %p225 = por %p223, %p224
      %p227 = scmp.ne.s32.totalorder %s210, %s226
      %p228 = scmp.eq.s32.totalorder %s30, 0
      %p229 = por %p227, %p228
      %s230 = ssub.s32 %s24, %s31
      %p231 = scmp.eq.s32.totalorder %s230, 0
      %s233 = sadd.s32 %s232, 1
      %s234 = scalar_select %p231, %s232, %s233
      %p237 = pneg %p231
      %p238 = scmp.eq.s32.totalorder %s24, 2
      %p239 = por %p237, %p238
      %p240 = scmp.ne.s32.totalorder %s232, %s235
      %p241 = scmp.eq.s32.totalorder %s24, 0
      %p242 = por %p240, %p241
      %p243 = scmp.ne.s32.totalorder %s232, %s235
      %p244 = scmp.eq.s32.totalorder %s29, 2
      %p245 = por %p243, %p244
      %p246 = scmp.ne.s32.totalorder %s235, %s236
      %p247 = scmp.eq.s32.totalorder %s29, 0
      %p248 = por %p246, %p247
      %p249 = scmp.ne.s32.totalorder %s235, %s236
      %p250 = scmp.eq.s32.totalorder %s30, 2
      %p251 = por %p249, %p250
      %p253 = scmp.ne.s32.totalorder %s236, %s252
      %p254 = scmp.eq.s32.totalorder %s30, 0
      %p255 = por %p253, %p254
      %s257 = sadd.s32 %s256, 1
      %p260 = scmp.eq.s32.totalorder %s24, 2
      %p261 = scmp.ne.s32.totalorder %s256, %s258
      %p262 = scmp.eq.s32.totalorder %s24, 0
      %p263 = por %p261, %p262
      %p264 = scmp.ne.s32.totalorder %s256, %s258
      %p265 = scmp.eq.s32.totalorder %s29, 2
      %p266 = por %p264, %p265
      %p267 = scmp.ne.s32.totalorder %s258, %s259
      %p268 = scmp.eq.s32.totalorder %s29, 0
      %p269 = por %p267, %p268
      %p270 = scmp.ne.s32.totalorder %s258, %s259
      %p271 = scmp.eq.s32.totalorder %s30, 2
      %p272 = por %p270, %p271
      %p274 = scmp.ne.s32.totalorder %s259, %s273
      %p275 = scmp.eq.s32.totalorder %s30, 0
      %p276 = por %p274, %p275
      %p277 = scmp.le.s32.totalorder 1, %s24
      %p278 = scmp.lt.s32.totalorder %s24, 4
      %p279 = pnand %p277, %p278
      %p280 = pneg %p279
      // Predicated region
      $region9: #{esm_embedder_forward.1} parent=5 // pred_check
        _
      $region10: #{esm_embedder_forward.1} parent=5 // pred_check_branch
        %282 = sbr.rel (%p279) target = $region12
      $region11: #{esm_embedder_forward.1} parent=5 // pred_region
        %s283 = ssub.s32 %s24, 1
        // Predicated region
        $region13: #{esm_embedder_forward.1} parent=11 // pred_check
          %p284 = pneg %p45
        $region14: #{esm_embedder_forward.1} parent=11 // pred_check_branch
          %286 = sbr.rel (%p284) target = $region16
        $region15: #{esm_embedder_forward.1} parent=11 // pred_region
          _
        $region16: #{esm_embedder_forward.1} parent=11 // pred_fallthru
          _
        // Predicated region
        $region17: #{esm_embedder_forward.1} parent=11 // pred_check
          %p287 = pneg %p66
        $region18: #{esm_embedder_forward.1} parent=11 // pred_check_branch
          %289 = sbr.rel (%p287) target = $region20
        $region19: #{esm_embedder_forward.1} parent=11 // pred_region
          _
        $region20: #{esm_embedder_forward.1} parent=11 // pred_fallthru
          _
      $region12: #{esm_embedder_forward.1} parent=5 // pred_fallthru
        _
      %p290 = scmp.lt.s32.totalorder %s24, 3
      // Predicated region
      $region21: #{esm_embedder_forward.1} parent=5 // pred_check
        %p291 = pneg %p290
      $region22: #{esm_embedder_forward.1} parent=5 // pred_check_branch
        %293 = sbr.rel (%p291) target = $region24
      $region23: #{esm_embedder_forward.1} parent=5 // pred_region
        // Predicated region
        $region25: #{esm_embedder_forward.1} parent=23 // pred_check
          %p294 = pneg %p86
        $region26: #{esm_embedder_forward.1} parent=23 // pred_check_branch
          %296 = sbr.rel (%p294) target = $region28
        $region27: #{esm_embedder_forward.1} parent=23 // pred_region
          %p297 = scmp.lt.s32.totalorder %s24, 2
          %s298 = scalar_select %p297, %s24, 2
          %s299 = smul.addr %s298, 8
          %s300 = scalar_lea.vmem %s2, %s299
        $region28: #{esm_embedder_forward.1} parent=23 // pred_fallthru
          _
        // Predicated region
        $region29: #{esm_embedder_forward.1} parent=23 // pred_check
          %p301 = pneg %p112
        $region30: #{esm_embedder_forward.1} parent=23 // pred_check_branch
          %303 = sbr.rel (%p301) target = $region32
        $region31: #{esm_embedder_forward.1} parent=23 // pred_region
          %s304 = sand.u32 %s102, 1
          %s305 = scalar_lea.sflag [#allocation4], %s304
          %s306 = sand.u32 %s102, 1
          %s307 = smul.addr %s306, 384
          %s308 = scalar_lea.vmem [#allocation3], %s307
          %310 = vsyncadd %s305, 0
          %s311 = smul.addr %s24, 48
          %s312 = smul.addr %s311, 8
          %s313 = scalar_lea.hbm %s3, %s312
          %s314 = sshll.u32 %s313, 4
          %s315 = int_to_ptr.hbm [resolvable:$true] %s314
          %s316 = sshll.u32 %s308, 4
          %s317 = int_to_ptr.vmem [resolvable:$true] %s316
          %322 = dma.hbm_to_vmem [thread:$0]  %s315, 6144, %s317, %s305, 384, 384, 24
        $region32: #{esm_embedder_forward.1} parent=23 // pred_fallthru
          _
        // Predicated region
        $region33: #{esm_embedder_forward.1} parent=23 // pred_check
          %p323 = pneg %p138
        $region34: #{esm_embedder_forward.1} parent=23 // pred_check_branch
          %325 = sbr.rel (%p323) target = $region36
        $region35: #{esm_embedder_forward.1} parent=23 // pred_region
          %p326 = scmp.lt.s32.totalorder %s24, 2
          %s327 = scalar_select %p326, %s24, 2
          %s328 = smul.addr %s327, 3
          %s329 = scalar_lea.vmem %s4, %s328
        $region36: #{esm_embedder_forward.1} parent=23 // pred_fallthru
          _
        // Predicated region
        $region37: #{esm_embedder_forward.1} parent=23 // pred_check
          %p330 = pneg %p164
        $region38: #{esm_embedder_forward.1} parent=23 // pred_check_branch
          %332 = sbr.rel (%p330) target = $region40
        $region39: #{esm_embedder_forward.1} parent=23 // pred_region
          %s333 = sand.u32 %s24, 1
          %s334 = scalar_lea.sflag [#allocation6], %s333
          %s335 = sand.u32 %s154, 1
          %s336 = smul.addr %s335, 128
          %s337 = scalar_lea.vmem [#allocation5], %s336
          %339 = vsyncadd %s334, 0
          %s340 = smul.addr %s24, 16
          %s341 = smul.addr %s340, 8
          %s342 = scalar_lea.hbm %s5, %s341
          %s343 = sshll.u32 %s342, 4
          %s344 = int_to_ptr.hbm [resolvable:$true] %s343
          %s345 = sshll.u32 %s337, 4
          %s346 = int_to_ptr.vmem [resolvable:$true] %s345
          %351 = dma.hbm_to_vmem [thread:$0]  %s344, 2048, %s346, %s334, 128, 128, 8
        $region40: #{esm_embedder_forward.1} parent=23 // pred_fallthru
          _
        // Predicated region
        $region41: #{esm_embedder_forward.1} parent=23 // pred_check
          %p352 = pneg %p190
        $region42: #{esm_embedder_forward.1} parent=23 // pred_check_branch
          %354 = sbr.rel (%p352) target = $region44
        $region43: #{esm_embedder_forward.1} parent=23 // pred_region
          %s355 = sand.u32 %s24, 1
          %s356 = scalar_lea.sflag [#allocation6], %s355
          %s357 = sand.u32 %s180, 1
          %s358 = smul.addr %s357, 256
          %s359 = scalar_lea.vmem [#allocation7], %s358
          %361 = vsyncadd %s356, 0
          %s362 = smul.addr %s24, 32
          %s363 = smul.addr %s362, 8
          %s364 = scalar_lea.hbm %s6, %s363
          %s365 = sshll.u32 %s364, 4
          %s366 = int_to_ptr.hbm [resolvable:$true] %s365
          %s367 = sshll.u32 %s359, 4
          %s368 = int_to_ptr.vmem [resolvable:$true] %s367
          %373 = dma.hbm_to_vmem [thread:$0]  %s366, 4096, %s368, %s356, 256, 256, 16
        $region44: #{esm_embedder_forward.1} parent=23 // pred_fallthru
          _
        // Predicated region
        $region45: #{esm_embedder_forward.1} parent=23 // pred_check
          %p374 = pneg %p216
        $region46: #{esm_embedder_forward.1} parent=23 // pred_check_branch
          %376 = sbr.rel (%p374) target = $region48
        $region47: #{esm_embedder_forward.1} parent=23 // pred_region
          %p377 = scmp.lt.s32.totalorder %s24, 2
          %s378 = scalar_select %p377, %s24, 2
          %s379 = smul.addr %s378, 2
          %s380 = scalar_lea.vmem %s7, %s379
        $region48: #{esm_embedder_forward.1} parent=23 // pred_fallthru
          _
        // Predicated region
        $region49: #{esm_embedder_forward.1} parent=23 // pred_check
          %p381 = pneg %p242
        $region50: #{esm_embedder_forward.1} parent=23 // pred_check_branch
          %383 = sbr.rel (%p381) target = $region52
        $region51: #{esm_embedder_forward.1} parent=23 // pred_region
          %s384 = sand.u32 %s232, 1
          %s385 = scalar_lea.sflag [#allocation9], %s384
          %s386 = sand.u32 %s232, 1
          %s387 = smul.addr %s386, 256
          %s388 = scalar_lea.vmem [#allocation8], %s387
          %390 = vsyncadd %s385, 0
          %s391 = smul.addr %s24, 32
          %s392 = smul.addr %s391, 8
          %s393 = scalar_lea.hbm %s8, %s392
          %s394 = sshll.u32 %s393, 4
          %s395 = int_to_ptr.hbm [resolvable:$true] %s394
          %s396 = sshll.u32 %s388, 4
          %s397 = int_to_ptr.vmem [resolvable:$true] %s396
          %402 = dma.hbm_to_vmem [thread:$0]  %s395, 4096, %s397, %s385, 128, 128, 8
        $region52: #{esm_embedder_forward.1} parent=23 // pred_fallthru
          _
      $region24: #{esm_embedder_forward.1} parent=5 // pred_fallthru
        _
      %p403 = scmp.le.s32.totalorder 1, %s24
      %p404 = scmp.lt.s32.totalorder %s24, 4
      %p405 = pnand %p403, %p404
      %p406 = pneg %p405
      // Predicated region
      $region53: #{esm_embedder_forward.1} parent=5 // pred_check
        _
      $region54: #{esm_embedder_forward.1} parent=5 // pred_check_branch
        %408 = sbr.rel (%p405) target = $region56
      $region55: #{esm_embedder_forward.1} parent=5 // pred_region
        %s409 = ssub.s32 %s24, 1
        %s410 = sand.u32 %s105, 1
        %s411 = scalar_lea.sflag [#allocation4], %s410
        %s412 = sand.u32 %s105, 1
        %s413 = smul.addr %s412, 384
        %s414 = scalar_lea.vmem [#allocation3], %s413
        // Predicated region
        $region57: #{esm_embedder_forward.1} parent=55 // pred_check
          %p415 = pneg %p118
        $region58: #{esm_embedder_forward.1} parent=55 // pred_check_branch
          %417 = sbr.rel (%p415) target = $region60
        $region59: #{esm_embedder_forward.1} parent=55 // pred_region
          %419 = dma.done %s411, 6144
        $region60: #{esm_embedder_forward.1} parent=55 // pred_fallthru
          _
        %s420 = sand.u32 %s29, 1
        %s421 = scalar_lea.sflag [#allocation6], %s420
        %s422 = sand.u32 %s157, 1
        %s423 = smul.addr %s422, 128
        %s424 = scalar_lea.vmem [#allocation5], %s423
        // Predicated region
        $region61: #{esm_embedder_forward.1} parent=55 // pred_check
          %p425 = pneg %p170
        $region62: #{esm_embedder_forward.1} parent=55 // pred_check_branch
          %427 = sbr.rel (%p425) target = $region64
        $region63: #{esm_embedder_forward.1} parent=55 // pred_region
          %429 = dma.done %s421, 2048
        $region64: #{esm_embedder_forward.1} parent=55 // pred_fallthru
          _
        %s430 = sand.u32 %s29, 1
        %s431 = scalar_lea.sflag [#allocation6], %s430
        %s432 = sand.u32 %s183, 1
        %s433 = smul.addr %s432, 256
        %s434 = scalar_lea.vmem [#allocation7], %s433
        // Predicated region
        $region65: #{esm_embedder_forward.1} parent=55 // pred_check
          %p435 = pneg %p196
        $region66: #{esm_embedder_forward.1} parent=55 // pred_check_branch
          %437 = sbr.rel (%p435) target = $region68
        $region67: #{esm_embedder_forward.1} parent=55 // pred_region
          %439 = dma.done %s431, 4096
        $region68: #{esm_embedder_forward.1} parent=55 // pred_fallthru
          _
        %s440 = sand.u32 %s235, 1
        %s441 = scalar_lea.sflag [#allocation9], %s440
        %s442 = sand.u32 %s235, 1
        %s443 = smul.addr %s442, 256
        %s444 = scalar_lea.vmem [#allocation8], %s443
        // Predicated region
        $region69: #{esm_embedder_forward.1} parent=55 // pred_check
          %p445 = pneg %p248
        $region70: #{esm_embedder_forward.1} parent=55 // pred_check_branch
          %447 = sbr.rel (%p445) target = $region72
        $region71: #{esm_embedder_forward.1} parent=55 // pred_region
          %449 = dma.done %s441, 4096
        $region72: #{esm_embedder_forward.1} parent=55 // pred_fallthru
          _
        %p450 = pneg %p45
        %p451 = pneg %p42
        %p452 = pneg %p66
        %p453 = pneg %p63
        %p454 = scmp.lt.s32.totalorder %s29, 2
        %s455 = scalar_select %p454, %s29, 2
        %s456 = smul.addr %s455, 8
        %s457 = scalar_lea.vmem %s2, %s456
        %p458 = pneg %p92
        %p459 = pneg %p89
        %s460 = sand.u32 %s105, 1
        %s461 = scalar_lea.sflag [#allocation4], %s460
        %s462 = sand.u32 %s105, 1
        %s463 = smul.addr %s462, 384
        %s464 = scalar_lea.vmem [#allocation3], %s463
        %p465 = pneg %p118
        %p466 = pneg %p115
        %p467 = scmp.lt.s32.totalorder %s29, 2
        %s468 = scalar_select %p467, %s29, 2
        %s469 = smul.addr %s468, 3
        %s470 = scalar_lea.vmem %s4, %s469
        %p471 = pneg %p144
        %p472 = pneg %p141
        %s473 = sand.u32 %s29, 1
        %s474 = scalar_lea.sflag [#allocation6], %s473
        %s475 = sand.u32 %s157, 1
        %s476 = smul.addr %s475, 128
        %s477 = scalar_lea.vmem [#allocation5], %s476
        %p478 = pneg %p170
        %p479 = pneg %p167
        %s480 = sand.u32 %s29, 1
        %s481 = scalar_lea.sflag [#allocation6], %s480
        %s482 = sand.u32 %s183, 1
        %s483 = smul.addr %s482, 256
        %s484 = scalar_lea.vmem [#allocation7], %s483
        %p485 = pneg %p196
        %p486 = pneg %p193
        %p487 = scmp.lt.s32.totalorder %s29, 2
        %s488 = scalar_select %p487, %s29, 2
        %s489 = smul.addr %s488, 2
        %s490 = scalar_lea.vmem %s7, %s489
        %p491 = pneg %p222
        %p492 = pneg %p219
        %s493 = sand.u32 %s235, 1
        %s494 = scalar_lea.sflag [#allocation9], %s493
        %s495 = sand.u32 %s235, 1
        %s496 = smul.addr %s495, 256
        %s497 = scalar_lea.vmem [#allocation8], %s496
        %p498 = pneg %p248
        %p499 = pneg %p245
        %p500 = pneg %p269
        %p501 = pneg %p266
        %p502 = scmp.lt.s32.totalorder %s29, 2
        %s503 = scalar_select %p502, %s29, 2
        %s504 = smul.addr %s503, 8
        %s505 = scalar_lea.vmem %s2, %s504
        %p506 = scmp.lt.s32.totalorder %s29, 2
        %s507 = scalar_select %p506, %s29, 2
        %s508 = smul.addr %s507, 3
        %s509 = scalar_lea.vmem %s4, %s508
        %p510 = scmp.lt.s32.totalorder %s29, 2
        %s511 = scalar_select %p510, %s29, 2
        %s512 = smul.addr %s511, 2
        %s513 = scalar_lea.vmem %s7, %s512
        %p514 = scmp.eq.s32.totalorder %s29, 0
        // Predicated region
        $region73: #{esm_embedder_forward.1} parent=55 // pred_check
          %p515 = pneg %p514
        $region74: #{esm_embedder_forward.1} parent=55 // pred_check_branch
          %517 = sbr.rel (%p515) target = $region76
        $region75: #{esm_embedder_forward.1} parent=55 // pred_region
          %v518 = vld [vmem:[%s0] sm:$0xff]
          %v519 = vld [vmem:[%s0 + $0x8] sm:$0xff]
          %v520 = vld [vmem:[%s1] sm:$0x1]
          %v521 = vld [vmem:[%s1 + $0x1] sm:$0x1]
          %522 = vadd.xlane.f32.xlu0 %v518
          %v523 = vpop.xlane.xlu0 %522
          %524 = vadd.xlane.f32.xlu0 %v519
          %v525 = vpop.xlane.xlu0 %524
          %v526 = vrcp.pop 128.0
          %v527 = vmul.f32 128.0, %v526
          %v528 = vsub.f32 1.0, %v527
          %v529 = vmul.f32 %v526, %v528
          %v530 = vadd.f32 %v526, %v529
          %vm531 = vweird.f32 %v526
          %v532 = vsel %vm531, %v526, %v530
          %v533 = vmul.f32 %v523, %v532
          %v534 = vmul.f32 %v525, %v532
          %v535 = vsub.f32 %v518, %v533
          %v536 = vsub.f32 %v519, %v534
          %v537 = vmul.f32 %v535, %v535
          %v538 = vmul.f32 %v536, %v536
          %539 = vadd.xlane.f32.xlu0 %v537
          %v540 = vpop.xlane.xlu0 %539
          %541 = vadd.xlane.f32.xlu0 %v538
          %v542 = vpop.xlane.xlu0 %541
          %v543 = vmul.f32 %v540, %v532
          %v544 = vmul.f32 %v542, %v532
          %v545 = vadd.f32 %v543, 1e-05
          %v546 = vadd.f32 %v544, 1e-05
          %v547 = vrsqrt.pop %v545
          %v548 = vmul.f32 %v547, %v545
          %v549 = vmul.f32 %v548, %v547
          %v550 = vmul.f32 0.5, %v549
          %v551 = vsub.f32 1.5, %v550
          %v552 = vmul.f32 %v547, %v551
          %vm553 = vweird.f32 %v545
          %vm554 = vweird.f32 %v547
          %vm555 = vmor %vm553, %vm554
          %v556 = vsel %vm555, %v547, %v552
          %v557 = vrsqrt.pop %v546
          %v558 = vmul.f32 %v557, %v546
          %v559 = vmul.f32 %v558, %v557
          %v560 = vmul.f32 0.5, %v559
          %v561 = vsub.f32 1.5, %v560
          %v562 = vmul.f32 %v557, %v561
          %vm563 = vweird.f32 %v546
          %vm564 = vweird.f32 %v557
          %vm565 = vmor %vm563, %vm564
          %v566 = vsel %vm565, %v557, %v562
          %v567 = vmul.f32 %v535, %v556
          %v568 = vmul.f32 %v536, %v566
          %v569 = vperm.slane %v520, 0
          %v570 = vmul.f32 %v567, %v569
          %v571 = vmul.f32 %v568, %v569
          %v572 = vperm.slane %v521, 0
          %v573 = vadd.f32 %v570, %v572
          %v574 = vadd.f32 %v571, %v572
          %575 = vst [vmem:[#allocation2] sm:$0xff] %v573
          %576 = vst [vmem:[#allocation2 + $0x8] sm:$0xff] %v574
        $region76: #{esm_embedder_forward.1} parent=55 // pred_fallthru
          _
        %v577 = vld [vmem:[#allocation2] sm:$0xff]
        %v578 = vld [vmem:[#allocation2 + $0x8] sm:$0xff]
        %v579 = vld [vmem:[%s505] sm:$0x1]
        %v580 = vld [vmem:[%s505 + $0x1] sm:$0x1]
        %581 = vadd.xlane.f32.xlu0 %v577
        %v582 = vpop.xlane.xlu0 %581
        %583 = vadd.xlane.f32.xlu0 %v578
        %v584 = vpop.xlane.xlu0 %583
        %v585 = vrcp.pop 128.0
        %v586 = vmul.f32 128.0, %v585
        %v587 = vsub.f32 1.0, %v586
        %v588 = vmul.f32 %v585, %v587
        %v589 = vadd.f32 %v585, %v588
        %vm590 = vweird.f32 %v585
        %v591 = vsel %vm590, %v585, %v589
        %v592 = vmul.f32 %v582, %v591
        %v593 = vmul.f32 %v584, %v591
        %v594 = vsub.f32 %v577, %v592
        %v595 = vsub.f32 %v578, %v593
        %v596 = vmul.f32 %v594, %v594
        %v597 = vmul.f32 %v595, %v595
        %598 = vadd.xlane.f32.xlu0 %v596
        %v599 = vpop.xlane.xlu0 %598
        %600 = vadd.xlane.f32.xlu0 %v597
        %v601 = vpop.xlane.xlu0 %600
        %v602 = vmul.f32 %v599, %v591
        %v603 = vmul.f32 %v601, %v591
        %v604 = vadd.f32 %v602, 1e-05
        %v605 = vadd.f32 %v603, 1e-05
        %v606 = vrsqrt.pop %v604
        %v607 = vmul.f32 %v606, %v604
        %v608 = vmul.f32 %v607, %v606
        %v609 = vmul.f32 0.5, %v608
        %v610 = vsub.f32 1.5, %v609
        %v611 = vmul.f32 %v606, %v610
        %vm612 = vweird.f32 %v604
        %vm613 = vweird.f32 %v606
        %vm614 = vmor %vm612, %vm613
        %v615 = vsel %vm614, %v606, %v611
        %v616 = vrsqrt.pop %v605
        %v617 = vmul.f32 %v616, %v605
        %v618 = vmul.f32 %v617, %v616
        %v619 = vmul.f32 0.5, %v618
        %v620 = vsub.f32 1.5, %v619
        %v621 = vmul.f32 %v616, %v620
        %vm622 = vweird.f32 %v605
        %vm623 = vweird.f32 %v616
        %vm624 = vmor %vm622, %vm623
        %v625 = vsel %vm624, %v616, %v621
        %v626 = vmul.f32 %v594, %v615
        %v627 = vmul.f32 %v595, %v625
        %v628 = vperm.slane %v579, 0
        %v629 = vmul.f32 %v626, %v628
        %v630 = vmul.f32 %v627, %v628
        %v631 = vperm.slane %v580, 0
        %v632 = vadd.f32 %v629, %v631
        %v633 = vadd.f32 %v630, %v631
        %v634 = vld [vmem:[%s414] sm:$0xff]
        %v635 = vld [vmem:[%s414 + $0x8] sm:$0xff]
        %v636 = vld [vmem:[%s414 + $0x10] sm:$0xff]
        %v637 = vld [vmem:[%s414 + $0x18] sm:$0xff]
        %v638 = vld [vmem:[%s414 + $0x20] sm:$0xff]
        %v639 = vld [vmem:[%s414 + $0x28] sm:$0xff]
        %v640 = vld [vmem:[%s414 + $0x30] sm:$0xff]
        %v641 = vld [vmem:[%s414 + $0x38] sm:$0xff]
        %v642 = vld [vmem:[%s414 + $0x40] sm:$0xff]
        %v643 = vld [vmem:[%s414 + $0x48] sm:$0xff]
        %v644 = vld [vmem:[%s414 + $0x50] sm:$0xff]
        %v645 = vld [vmem:[%s414 + $0x58] sm:$0xff]
        %v646 = vld [vmem:[%s414 + $0x60] sm:$0xff]
        %v647 = vld [vmem:[%s414 + $0x68] sm:$0xff]
        %v648 = vld [vmem:[%s414 + $0x70] sm:$0xff]
        %v649 = vld [vmem:[%s414 + $0x78] sm:$0xff]
        %v650 = vld [vmem:[%s414 + $0x80] sm:$0xff]
        %v651 = vld [vmem:[%s414 + $0x88] sm:$0xff]
        %v652 = vld [vmem:[%s414 + $0x90] sm:$0xff]
        %v653 = vld [vmem:[%s414 + $0x98] sm:$0xff]
        %v654 = vld [vmem:[%s414 + $0xa0] sm:$0xff]
        %v655 = vld [vmem:[%s414 + $0xa8] sm:$0xff]
        %v656 = vld [vmem:[%s414 + $0xb0] sm:$0xff]
        %v657 = vld [vmem:[%s414 + $0xb8] sm:$0xff]
        %v658 = vld [vmem:[%s414 + $0xc0] sm:$0xff]
        %v659 = vld [vmem:[%s414 + $0xc8] sm:$0xff]
        %v660 = vld [vmem:[%s414 + $0xd0] sm:$0xff]
        %v661 = vld [vmem:[%s414 + $0xd8] sm:$0xff]
        %v662 = vld [vmem:[%s414 + $0xe0] sm:$0xff]
        %v663 = vld [vmem:[%s414 + $0xe8] sm:$0xff]
        %v664 = vld [vmem:[%s414 + $0xf0] sm:$0xff]
        %v665 = vld [vmem:[%s414 + $0xf8] sm:$0xff]
        %v666 = vld [vmem:[%s414 + $0x100] sm:$0xff]
        %v667 = vld [vmem:[%s414 + $0x108] sm:$0xff]
        %v668 = vld [vmem:[%s414 + $0x110] sm:$0xff]
        %v669 = vld [vmem:[%s414 + $0x118] sm:$0xff]
        %v670 = vld [vmem:[%s414 + $0x120] sm:$0xff]
        %v671 = vld [vmem:[%s414 + $0x128] sm:$0xff]
        %v672 = vld [vmem:[%s414 + $0x130] sm:$0xff]
        %v673 = vld [vmem:[%s414 + $0x138] sm:$0xff]
        %v674 = vld [vmem:[%s414 + $0x140] sm:$0xff]
        %v675 = vld [vmem:[%s414 + $0x148] sm:$0xff]
        %v676 = vld [vmem:[%s414 + $0x150] sm:$0xff]
        %v677 = vld [vmem:[%s414 + $0x158] sm:$0xff]
        %v678 = vld [vmem:[%s414 + $0x160] sm:$0xff]
        %v679 = vld [vmem:[%s414 + $0x168] sm:$0xff]
        %v680 = vld [vmem:[%s414 + $0x170] sm:$0xff]
        %v681 = vld [vmem:[%s414 + $0x178] sm:$0xff]
        %v682 = vld [vmem:[%s509] sm:$0x7]
        %v684 = vperm.slane %v682, 0
        %v685 = vperm.slane %v682, 1
        %v686 = vperm.slane %v682, 2
        %690 = vmatpush.msra.mxu0 %v679
        %691 = vmatpush.msra.mxu0 %v676
        %692 = vmatpush.msra.mxu0 %v673
        %693 = vmatpush.msra.mxu0 %v670
        %694 = vmatpush.msra.mxu0 %v667
        %695 = vmatpush.msra.mxu0 %v664
        %696 = vmatpush.msra.mxu0 %v661
        %697 = vmatpush.msra.mxu0 %v658
        %698 = vmatpush.msra.mxu0 %v655
        %699 = vmatpush.msra.mxu0 %v652
        %700 = vmatpush.msra.mxu0 %v649
        %701 = vmatpush.msra.mxu0 %v646
        %702 = vmatpush.msra.mxu0 %v643
        %703 = vmatpush.msra.mxu0 %v640
        %704 = vmatpush.msra.mxu0 %v637
        %705 = vmatpush.msra.mxu0 %v634
        %706 = vmatmul.f32.gmra.mxu0 %v632
        %v707 = vpop.f32.mrf.mxu0
        %v708 = vadd.f32 %v684, %v707
        %709 = vmatmul.f32.gmra.mxu0 %v633
        %v710 = vpop.f32.mrf.mxu0
        %v711 = vadd.f32 %v684, %v710
        %712 = vdwg.mxu0
        %713 = vmatpush.msra.mxu0 %v680
        %714 = vmatpush.msra.mxu0 %v677
        %715 = vmatpush.msra.mxu0 %v674
        %716 = vmatpush.msra.mxu0 %v671
        %717 = vmatpush.msra.mxu0 %v668
        %718 = vmatpush.msra.mxu0 %v665
        %719 = vmatpush.msra.mxu0 %v662
        %720 = vmatpush.msra.mxu0 %v659
        %721 = vmatpush.msra.mxu0 %v656
        %722 = vmatpush.msra.mxu0 %v653
        %723 = vmatpush.msra.mxu0 %v650
        %724 = vmatpush.msra.mxu0 %v647
        %725 = vmatpush.msra.mxu0 %v644
        %726 = vmatpush.msra.mxu0 %v641
        %727 = vmatpush.msra.mxu0 %v638
        %728 = vmatpush.msra.mxu0 %v635
        %729 = vmatmul.f32.gmra.mxu0 %v632
        %v730 = vpop.f32.mrf.mxu0
        %v731 = vadd.f32 %v685, %v730
        %732 = vmatmul.f32.gmra.mxu0 %v633
        %v733 = vpop.f32.mrf.mxu0
        %v734 = vadd.f32 %v685, %v733
        %735 = vdwg.mxu0
        %736 = vmatpush.msra.mxu0 %v681
        %737 = vmatpush.msra.mxu0 %v678
        %738 = vmatpush.msra.mxu0 %v675
        %739 = vmatpush.msra.mxu0 %v672
        %740 = vmatpush.msra.mxu0 %v669
        %741 = vmatpush.msra.mxu0 %v666
        %742 = vmatpush.msra.mxu0 %v663
        %743 = vmatpush.msra.mxu0 %v660
        %744 = vmatpush.msra.mxu0 %v657
        %745 = vmatpush.msra.mxu0 %v654
        %746 = vmatpush.msra.mxu0 %v651
        %747 = vmatpush.msra.mxu0 %v648
        %748 = vmatpush.msra.mxu0 %v645
        %749 = vmatpush.msra.mxu0 %v642
        %750 = vmatpush.msra.mxu0 %v639
        %751 = vmatpush.msra.mxu0 %v636
        %752 = vmatmul.f32.gmra.mxu0 %v632
        %v753 = vpop.f32.mrf.mxu0
        %v754 = vadd.f32 %v686, %v753
        %755 = vmatmul.f32.gmra.mxu0 %v633
        %v756 = vpop.f32.mrf.mxu0
        %v757 = vadd.f32 %v686, %v756
        %758 = vdwg.mxu0
        %v759 = vlaneseq
        %v760 = vand.u32 %v759, 127
        %vm761 = vcmp.lt.s32.totalorder %v760, 10
        %v762 = vmul.f32 %v708, 0.17677669
        %v763 = vmul.f32 %v711, 0.17677669
        %vm764 = vcmask 261120
        %v766 = vsel %vm764, %v762, 0
        %v769 = vsel %vm764, %v763, 0
        %v772 = vsel %vm764, %v731, 0
        %v775 = vsel %vm764, %v734, 0
        %777 = vmatpush.xpose.msra.mxu0 0.0
        %778 = vmatpush.xpose.msra.mxu0 0.0
        %779 = vmatpush.xpose.msra.mxu0 0.0
        %780 = vmatpush.xpose.msra.mxu0 0.0
        %781 = vmatpush.xpose.msra.mxu0 0.0
        %782 = vmatpush.xpose.msra.mxu0 0.0
        %783 = vmatpush.xpose.msra.mxu0 0.0
        %784 = vmatpush.xpose.msra.mxu0 0.0
        %785 = vmatpush.xpose.msra.mxu0 0.0
        %786 = vmatpush.xpose.msra.mxu0 0.0
        %787 = vmatpush.xpose.msra.mxu0 0.0
        %788 = vmatpush.xpose.msra.mxu0 0.0
        %789 = vmatpush.xpose.msra.mxu0 0.0
        %790 = vmatpush.xpose.msra.mxu0 0.0
        %791 = vmatpush.xpose.msra.mxu0 %v775
        %792 = vmatpush.xpose.msra.mxu0 %v772
        %793 = vmatmul.f32.gmra.mxu0 %v766
        %v794 = vpop.f32.mrf.mxu0
        %v795 = vadd.f32 0.0, %v794
        %796 = vmatmul.f32.gmra.mxu0 %v769
        %v797 = vpop.f32.mrf.mxu0
        %v798 = vadd.f32 0.0, %v797
        %799 = vdwg.mxu0
        %v800 = vsel %vm761, %v795, -1e+30
        %v801 = vsel %vm761, %v798, -1e+30
        %vm802 = vcmask 130048
        %v803 = vsel %vm802, %v800, -inf
        %804 = vmax.xlane.f32.xlu0 %v803
        %v805 = vpop.xlane.xlu0 %804
        %v806 = vsel %vm802, %v801, -inf
        %807 = vmax.xlane.f32.xlu0 %v806
        %v808 = vpop.xlane.xlu0 %807
        %v809 = vsub.f32 %v800, %v805
        %v810 = vsub.f32 %v801, %v808
        %v811 = vmul.f32 %v809, 1.442695
        %v812 = vpow.pop %v811
        %v813 = vmul.f32 %v810, 1.442695
        %v814 = vpow.pop %v813
        %v815 = vsel %vm802, %v812, 0.0
        %816 = vadd.xlane.f32.xlu0 %v815
        %v817 = vpop.xlane.xlu0 %816
        %v818 = vsel %vm802, %v814, 0.0
        %819 = vadd.xlane.f32.xlu0 %v818
        %v820 = vpop.xlane.xlu0 %819
        %v821 = vrcp.pop %v817
        %v822 = vrcp.pop %v820
        %v823 = vmul.f32 %v812, %v821
        %v824 = vmul.f32 %v814, %v822
        %v826 = vsel %vm802, %v823, 0
        %v829 = vsel %vm802, %v824, 0
        %831 = vmatpush.msra.mxu0 0.0
        %832 = vmatpush.msra.mxu0 0.0
        %833 = vmatpush.msra.mxu0 0.0
        %834 = vmatpush.msra.mxu0 0.0
        %835 = vmatpush.msra.mxu0 0.0
        %836 = vmatpush.msra.mxu0 0.0
        %837 = vmatpush.msra.mxu0 0.0
        %838 = vmatpush.msra.mxu0 0.0
        %839 = vmatpush.msra.mxu0 0.0
        %840 = vmatpush.msra.mxu0 0.0
        %841 = vmatpush.msra.mxu0 0.0
        %842 = vmatpush.msra.mxu0 0.0
        %843 = vmatpush.msra.mxu0 0.0
        %844 = vmatpush.msra.mxu0 0.0
        %845 = vmatpush.msra.mxu0 %v757
        %846 = vmatpush.msra.mxu0 %v754
        %847 = vmatmul.f32.gmra.mxu0 %v826
        %v848 = vpop.f32.mrf.mxu0
        %v849 = vadd.f32 0.0, %v848
        %850 = vmatmul.f32.gmra.mxu0 %v829
        %v851 = vpop.f32.mrf.mxu0
        %v852 = vadd.f32 0.0, %v851
        %853 = vdwg.mxu0
        %854 = vrot.lane.b32.xlu0 %v762, 96
        %v855 = vpop.permute.xlu0 %854
        %856 = vrot.lane.b32.xlu0 %v763, 96
        %v857 = vpop.permute.xlu0 %856
        %858 = vrot.lane.b32.xlu0 %v731, 96
        %v859 = vpop.permute.xlu0 %858
        %860 = vrot.lane.b32.xlu0 %v734, 96
        %v861 = vpop.permute.xlu0 %860
        %v862 = vsel %vm764, %v855, 0
        %v864 = vsel %vm764, %v857, 0
        %v866 = vsel %vm764, %v859, 0
        %v868 = vsel %vm764, %v861, 0
        %870 = vmatpush.xpose.msra.mxu0 0.0
        %871 = vmatpush.xpose.msra.mxu0 0.0
        %872 = vmatpush.xpose.msra.mxu0 0.0
        %873 = vmatpush.xpose.msra.mxu0 0.0
        %874 = vmatpush.xpose.msra.mxu0 0.0
        %875 = vmatpush.xpose.msra.mxu0 0.0
        %876 = vmatpush.xpose.msra.mxu0 0.0
        %877 = vmatpush.xpose.msra.mxu0 0.0
        %878 = vmatpush.xpose.msra.mxu0 0.0
        %879 = vmatpush.xpose.msra.mxu0 0.0
        %880 = vmatpush.xpose.msra.mxu0 0.0
        %881 = vmatpush.xpose.msra.mxu0 0.0
        %882 = vmatpush.xpose.msra.mxu0 0.0
        %883 = vmatpush.xpose.msra.mxu0 0.0
        %884 = vmatpush.xpose.msra.mxu0 %v868
        %885 = vmatpush.xpose.msra.mxu0 %v866
        %886 = vmatmul.f32.gmra.mxu0 %v862
        %v887 = vpop.f32.mrf.mxu0
        %v888 = vadd.f32 0.0, %v887
        %889 = vmatmul.f32.gmra.mxu0 %v864
        %v890 = vpop.f32.mrf.mxu0
        %v891 = vadd.f32 0.0, %v890
        %892 = vdwg.mxu0
        %v893 = vsel %vm761, %v888, -1e+30
        %v894 = vsel %vm761, %v891, -1e+30
        %v895 = vsel %vm802, %v893, -inf
        %896 = vmax.xlane.f32.xlu0 %v895
        %v897 = vpop.xlane.xlu0 %896
        %v898 = vsel %vm802, %v894, -inf
        %899 = vmax.xlane.f32.xlu0 %v898
        %v900 = vpop.xlane.xlu0 %899
        %v901 = vsub.f32 %v893, %v897
        %v902 = vsub.f32 %v894, %v900
        %v903 = vmul.f32 %v901, 1.442695
        %v904 = vpow.pop %v903
        %v905 = vmul.f32 %v902, 1.442695
        %v906 = vpow.pop %v905
        %v907 = vsel %vm802, %v904, 0.0
        %908 = vadd.xlane.f32.xlu0 %v907
        %v909 = vpop.xlane.xlu0 %908
        %v910 = vsel %vm802, %v906, 0.0
        %911 = vadd.xlane.f32.xlu0 %v910
        %v912 = vpop.xlane.xlu0 %911
        %v913 = vrcp.pop %v909
        %v914 = vrcp.pop %v912
        %v915 = vmul.f32 %v904, %v913
        %v916 = vmul.f32 %v906, %v914
        %919 = vrot.lane.b32.xlu0 %v754, 96
        %v920 = vpop.permute.xlu0 %919
        %921 = vrot.lane.b32.xlu0 %v757, 96
        %v922 = vpop.permute.xlu0 %921
        %v926 = vsel %vm802, %v915, 0
        %v929 = vsel %vm802, %v916, 0
        %931 = vmatpush.msra.mxu0 0.0
        %932 = vmatpush.msra.mxu0 0.0
        %933 = vmatpush.msra.mxu0 0.0
        %934 = vmatpush.msra.mxu0 0.0
        %935 = vmatpush.msra.mxu0 0.0
        %936 = vmatpush.msra.mxu0 0.0
        %937 = vmatpush.msra.mxu0 0.0
        %938 = vmatpush.msra.mxu0 0.0
        %939 = vmatpush.msra.mxu0 0.0
        %940 = vmatpush.msra.mxu0 0.0
        %941 = vmatpush.msra.mxu0 0.0
        %942 = vmatpush.msra.mxu0 0.0
        %943 = vmatpush.msra.mxu0 0.0
        %944 = vmatpush.msra.mxu0 0.0
        %945 = vmatpush.msra.mxu0 %v922
        %946 = vmatpush.msra.mxu0 %v920
        %947 = vmatmul.f32.gmra.mxu0 %v926
        %v948 = vpop.f32.mrf.mxu0
        %v949 = vadd.f32 0.0, %v948
        %950 = vmatmul.f32.gmra.mxu0 %v929
        %v951 = vpop.f32.mrf.mxu0
        %v952 = vadd.f32 0.0, %v951
        %953 = vdwg.mxu0
        %954 = vrot.lane.b32.xlu0 %v762, 64
        %v955 = vpop.permute.xlu0 %954
        %956 = vrot.lane.b32.xlu0 %v763, 64
        %v957 = vpop.permute.xlu0 %956
        %958 = vrot.lane.b32.xlu0 %v731, 64
        %v959 = vpop.permute.xlu0 %958
        %960 = vrot.lane.b32.xlu0 %v734, 64
        %v961 = vpop.permute.xlu0 %960
        %v962 = vsel %vm764, %v955, 0
        %v964 = vsel %vm764, %v957, 0
        %v966 = vsel %vm764, %v959, 0
        %v968 = vsel %vm764, %v961, 0
        %970 = vmatpush.xpose.msra.mxu0 0.0
        %971 = vmatpush.xpose.msra.mxu0 0.0
        %972 = vmatpush.xpose.msra.mxu0 0.0
        %973 = vmatpush.xpose.msra.mxu0 0.0
        %974 = vmatpush.xpose.msra.mxu0 0.0
        %975 = vmatpush.xpose.msra.mxu0 0.0
        %976 = vmatpush.xpose.msra.mxu0 0.0
        %977 = vmatpush.xpose.msra.mxu0 0.0
        %978 = vmatpush.xpose.msra.mxu0 0.0
        %979 = vmatpush.xpose.msra.mxu0 0.0
        %980 = vmatpush.xpose.msra.mxu0 0.0
        %981 = vmatpush.xpose.msra.mxu0 0.0
        %982 = vmatpush.xpose.msra.mxu0 0.0
        %983 = vmatpush.xpose.msra.mxu0 0.0
        %984 = vmatpush.xpose.msra.mxu0 %v968
        %985 = vmatpush.xpose.msra.mxu0 %v966
        %986 = vmatmul.f32.gmra.mxu0 %v962
        %v987 = vpop.f32.mrf.mxu0
        %v988 = vadd.f32 0.0, %v987
        %989 = vmatmul.f32.gmra.mxu0 %v964
        %v990 = vpop.f32.mrf.mxu0
        %v991 = vadd.f32 0.0, %v990
        %992 = vdwg.mxu0
        %v993 = vsel %vm761, %v988, -1e+30
        %v994 = vsel %vm761, %v991, -1e+30
        %v995 = vsel %vm802, %v993, -inf
        %996 = vmax.xlane.f32.xlu0 %v995
        %v997 = vpop.xlane.xlu0 %996
        %v998 = vsel %vm802, %v994, -inf
        %999 = vmax.xlane.f32.xlu0 %v998
        %v1000 = vpop.xlane.xlu0 %999
        %v1001 = vsub.f32 %v993, %v997
        %v1002 = vsub.f32 %v994, %v1000
        %v1003 = vmul.f32 %v1001, 1.442695
        %v1004 = vpow.pop %v1003
        %v1005 = vmul.f32 %v1002, 1.442695
        %v1006 = vpow.pop %v1005
        %v1007 = vsel %vm802, %v1004, 0.0
        %1008 = vadd.xlane.f32.xlu0 %v1007
        %v1009 = vpop.xlane.xlu0 %1008
        %v1010 = vsel %vm802, %v1006, 0.0
        %1011 = vadd.xlane.f32.xlu0 %v1010
        %v1012 = vpop.xlane.xlu0 %1011
        %v1013 = vrcp.pop %v1009
        %v1014 = vrcp.pop %v1012
        %v1015 = vmul.f32 %v1004, %v1013
        %v1016 = vmul.f32 %v1006, %v1014
        %1017 = vrot.lane.b32.xlu0 %v754, 64
        %v1018 = vpop.permute.xlu0 %1017
        %1019 = vrot.lane.b32.xlu0 %v757, 64
        %v1020 = vpop.permute.xlu0 %1019
        %v1024 = vsel %vm802, %v1015, 0
        %v1027 = vsel %vm802, %v1016, 0
        %1029 = vmatpush.msra.mxu0 0.0
        %1030 = vmatpush.msra.mxu0 0.0
        %1031 = vmatpush.msra.mxu0 0.0
        %1032 = vmatpush.msra.mxu0 0.0
        %1033 = vmatpush.msra.mxu0 0.0
        %1034 = vmatpush.msra.mxu0 0.0
        %1035 = vmatpush.msra.mxu0 0.0
        %1036 = vmatpush.msra.mxu0 0.0
        %1037 = vmatpush.msra.mxu0 0.0
        %1038 = vmatpush.msra.mxu0 0.0
        %1039 = vmatpush.msra.mxu0 0.0
        %1040 = vmatpush.msra.mxu0 0.0
        %1041 = vmatpush.msra.mxu0 0.0
        %1042 = vmatpush.msra.mxu0 0.0
        %1043 = vmatpush.msra.mxu0 %v1020
        %1044 = vmatpush.msra.mxu0 %v1018
        %1045 = vmatmul.f32.gmra.mxu0 %v1024
        %v1046 = vpop.f32.mrf.mxu0
        %v1047 = vadd.f32 0.0, %v1046
        %1048 = vmatmul.f32.gmra.mxu0 %v1027
        %v1049 = vpop.f32.mrf.mxu0
        %v1050 = vadd.f32 0.0, %v1049
        %1051 = vdwg.mxu0
        %1052 = vrot.lane.b32.xlu0 %v762, 32
        %v1053 = vpop.permute.xlu0 %1052
        %1054 = vrot.lane.b32.xlu0 %v763, 32
        %v1055 = vpop.permute.xlu0 %1054
        %1056 = vrot.lane.b32.xlu0 %v731, 32
        %v1057 = vpop.permute.xlu0 %1056
        %1058 = vrot.lane.b32.xlu0 %v734, 32
        %v1059 = vpop.permute.xlu0 %1058
        %v1060 = vsel %vm764, %v1053, 0
        %v1062 = vsel %vm764, %v1055, 0
        %v1064 = vsel %vm764, %v1057, 0
        %v1066 = vsel %vm764, %v1059, 0
        %1068 = vmatpush.xpose.msra.mxu0 0.0
        %1069 = vmatpush.xpose.msra.mxu0 0.0
        %1070 = vmatpush.xpose.msra.mxu0 0.0
        %1071 = vmatpush.xpose.msra.mxu0 0.0
        %1072 = vmatpush.xpose.msra.mxu0 0.0
        %1073 = vmatpush.xpose.msra.mxu0 0.0
        %1074 = vmatpush.xpose.msra.mxu0 0.0
        %1075 = vmatpush.xpose.msra.mxu0 0.0
        %1076 = vmatpush.xpose.msra.mxu0 0.0
        %1077 = vmatpush.xpose.msra.mxu0 0.0
        %1078 = vmatpush.xpose.msra.mxu0 0.0
        %1079 = vmatpush.xpose.msra.mxu0 0.0
        %1080 = vmatpush.xpose.msra.mxu0 0.0
        %1081 = vmatpush.xpose.msra.mxu0 0.0
        %1082 = vmatpush.xpose.msra.mxu0 %v1066
        %1083 = vmatpush.xpose.msra.mxu0 %v1064
        %1084 = vmatmul.f32.gmra.mxu0 %v1060
        %v1085 = vpop.f32.mrf.mxu0
        %v1086 = vadd.f32 0.0, %v1085
        %1087 = vmatmul.f32.gmra.mxu0 %v1062
        %v1088 = vpop.f32.mrf.mxu0
        %v1089 = vadd.f32 0.0, %v1088
        %1090 = vdwg.mxu0
        %v1091 = vsel %vm761, %v1086, -1e+30
        %v1092 = vsel %vm761, %v1089, -1e+30
        %v1093 = vsel %vm802, %v1091, -inf
        %1094 = vmax.xlane.f32.xlu0 %v1093
        %v1095 = vpop.xlane.xlu0 %1094
        %v1096 = vsel %vm802, %v1092, -inf
        %1097 = vmax.xlane.f32.xlu0 %v1096
        %v1098 = vpop.xlane.xlu0 %1097
        %v1099 = vsub.f32 %v1091, %v1095
        %v1100 = vsub.f32 %v1092, %v1098
        %v1101 = vmul.f32 %v1099, 1.442695
        %v1102 = vpow.pop %v1101
        %v1103 = vmul.f32 %v1100, 1.442695
        %v1104 = vpow.pop %v1103
        %v1105 = vsel %vm802, %v1102, 0.0
        %1106 = vadd.xlane.f32.xlu0 %v1105
        %v1107 = vpop.xlane.xlu0 %1106
        %v1108 = vsel %vm802, %v1104, 0.0
        %1109 = vadd.xlane.f32.xlu0 %v1108
        %v1110 = vpop.xlane.xlu0 %1109
        %v1111 = vrcp.pop %v1107
        %v1112 = vrcp.pop %v1110
        %v1113 = vmul.f32 %v1102, %v1111
        %v1114 = vmul.f32 %v1104, %v1112
        %1115 = vrot.lane.b32.xlu0 %v754, 32
        %v1116 = vpop.permute.xlu0 %1115
        %1117 = vrot.lane.b32.xlu0 %v757, 32
        %v1118 = vpop.permute.xlu0 %1117
        %v1122 = vsel %vm802, %v1113, 0
        %v1125 = vsel %vm802, %v1114, 0
        %1127 = vmatpush.msra.mxu0 0.0
        %1128 = vmatpush.msra.mxu0 0.0
        %1129 = vmatpush.msra.mxu0 0.0
        %1130 = vmatpush.msra.mxu0 0.0
        %1131 = vmatpush.msra.mxu0 0.0
        %1132 = vmatpush.msra.mxu0 0.0
        %1133 = vmatpush.msra.mxu0 0.0
        %1134 = vmatpush.msra.mxu0 0.0
        %1135 = vmatpush.msra.mxu0 0.0
        %1136 = vmatpush.msra.mxu0 0.0
        %1137 = vmatpush.msra.mxu0 0.0
        %1138 = vmatpush.msra.mxu0 0.0
        %1139 = vmatpush.msra.mxu0 0.0
        %1140 = vmatpush.msra.mxu0 0.0
        %1141 = vmatpush.msra.mxu0 %v1118
        %1142 = vmatpush.msra.mxu0 %v1116
        %1143 = vmatmul.f32.gmra.mxu0 %v1122
        %v1144 = vpop.f32.mrf.mxu0
        %v1145 = vadd.f32 0.0, %v1144
        %1146 = vmatmul.f32.gmra.mxu0 %v1125
        %v1147 = vpop.f32.mrf.mxu0
        %v1148 = vadd.f32 0.0, %v1147
        %1149 = vdwg.mxu0
        %1152 = vrot.lane.b32.xlu0 %v949, 32
        %v1153 = vpop.permute.xlu0 %1152
        %1154 = vrot.lane.b32.xlu0 %v952, 32
        %v1155 = vpop.permute.xlu0 %1154
        %1160 = vrot.lane.b32.xlu0 %v1047, 64
        %v1161 = vpop.permute.xlu0 %1160
        %1162 = vrot.lane.b32.xlu0 %v1050, 64
        %v1163 = vpop.permute.xlu0 %1162
        %1168 = vrot.lane.b32.xlu0 %v1145, 96
        %v1169 = vpop.permute.xlu0 %1168
        %1170 = vrot.lane.b32.xlu0 %v1148, 96
        %v1171 = vpop.permute.xlu0 %1170
        %v1174 = vsel %vm764, %v849, %v1153
        %v1175 = vsel %vm764, %v852, %v1155
        %vm1176 = vcmask 523264
        %v1177 = vsel %vm1176, %v1174, %v1161
        %v1178 = vsel %vm1176, %v1175, %v1163
        %vm1179 = vcmask 785408
        %v1180 = vsel %vm1179, %v1177, %v1169
        %v1181 = vsel %vm1179, %v1178, %v1171
        %v1182 = vld [vmem:[%s424] sm:$0xff]
        %v1183 = vld [vmem:[%s424 + $0x8] sm:$0xff]
        %v1184 = vld [vmem:[%s424 + $0x10] sm:$0xff]
        %v1185 = vld [vmem:[%s424 + $0x18] sm:$0xff]
        %v1186 = vld [vmem:[%s424 + $0x20] sm:$0xff]
        %v1187 = vld [vmem:[%s424 + $0x28] sm:$0xff]
        %v1188 = vld [vmem:[%s424 + $0x30] sm:$0xff]
        %v1189 = vld [vmem:[%s424 + $0x38] sm:$0xff]
        %v1190 = vld [vmem:[%s424 + $0x40] sm:$0xff]
        %v1191 = vld [vmem:[%s424 + $0x48] sm:$0xff]
        %v1192 = vld [vmem:[%s424 + $0x50] sm:$0xff]
        %v1193 = vld [vmem:[%s424 + $0x58] sm:$0xff]
        %v1194 = vld [vmem:[%s424 + $0x60] sm:$0xff]
        %v1195 = vld [vmem:[%s424 + $0x68] sm:$0xff]
        %v1196 = vld [vmem:[%s424 + $0x70] sm:$0xff]
        %v1197 = vld [vmem:[%s424 + $0x78] sm:$0xff]
        %1198 = vmatpush.msra.mxu0 %v1197
        %1199 = vmatpush.msra.mxu0 %v1196
        %1200 = vmatpush.msra.mxu0 %v1195
        %1201 = vmatpush.msra.mxu0 %v1194
        %1202 = vmatpush.msra.mxu0 %v1193
        %1203 = vmatpush.msra.mxu0 %v1192
        %1204 = vmatpush.msra.mxu0 %v1191
        %1205 = vmatpush.msra.mxu0 %v1190
        %1206 = vmatpush.msra.mxu0 %v1189
        %1207 = vmatpush.msra.mxu0 %v1188
        %1208 = vmatpush.msra.mxu0 %v1187
        %1209 = vmatpush.msra.mxu0 %v1186
        %1210 = vmatpush.msra.mxu0 %v1185
        %1211 = vmatpush.msra.mxu0 %v1184
        %1212 = vmatpush.msra.mxu0 %v1183
        %1213 = vmatpush.msra.mxu0 %v1182
        %1214 = vmatmul.f32.gmra.mxu0 %v1180
        %v1215 = vpop.f32.mrf.mxu0
        %v1216 = vadd.f32 0.0, %v1215
        %1217 = vmatmul.f32.gmra.mxu0 %v1181
        %v1218 = vpop.f32.mrf.mxu0
        %v1219 = vadd.f32 0.0, %v1218
        %1220 = vdwg.mxu0
        %v1221 = vadd.f32 %v577, %v1216
        %v1222 = vadd.f32 %v578, %v1219
        %v1223 = vld [vmem:[%s505 + $0x4] sm:$0x1]
        %v1224 = vperm.slane %v1223, 0
        %v1225 = vadd.f32 %v1221, %v1224
        %v1226 = vadd.f32 %v1222, %v1224
        %v1227 = vld [vmem:[%s505 + $0x2] sm:$0x1]
        %v1228 = vld [vmem:[%s505 + $0x3] sm:$0x1]
        %1229 = vadd.xlane.f32.xlu0 %v1225
        %v1230 = vpop.xlane.xlu0 %1229
        %1231 = vadd.xlane.f32.xlu0 %v1226
        %v1232 = vpop.xlane.xlu0 %1231
        %v1233 = vmul.f32 %v1230, %v591
        %v1234 = vmul.f32 %v1232, %v591
        %v1235 = vsub.f32 %v1225, %v1233
        %v1236 = vsub.f32 %v1226, %v1234
        %v1237 = vmul.f32 %v1235, %v1235
        %v1238 = vmul.f32 %v1236, %v1236
        %1239 = vadd.xlane.f32.xlu0 %v1237
        %v1240 = vpop.xlane.xlu0 %1239
        %1241 = vadd.xlane.f32.xlu0 %v1238
        %v1242 = vpop.xlane.xlu0 %1241
        %v1243 = vmul.f32 %v1240, %v591
        %v1244 = vmul.f32 %v1242, %v591
        %v1245 = vadd.f32 %v1243, 1e-05
        %v1246 = vadd.f32 %v1244, 1e-05
        %v1247 = vrsqrt.pop %v1245
        %v1248 = vmul.f32 %v1247, %v1245
        %v1249 = vmul.f32 %v1248, %v1247
        %v1250 = vmul.f32 0.5, %v1249
        %v1251 = vsub.f32 1.5, %v1250
        %v1252 = vmul.f32 %v1247, %v1251
        %vm1253 = vweird.f32 %v1245
        %vm1254 = vweird.f32 %v1247
        %vm1255 = vmor %vm1253, %vm1254
        %v1256 = vsel %vm1255, %v1247, %v1252
        %v1257 = vrsqrt.pop %v1246
        %v1258 = vmul.f32 %v1257, %v1246
        %v1259 = vmul.f32 %v1258, %v1257
        %v1260 = vmul.f32 0.5, %v1259
        %v1261 = vsub.f32 1.5, %v1260
        %v1262 = vmul.f32 %v1257, %v1261
        %vm1263 = vweird.f32 %v1246
        %vm1264 = vweird.f32 %v1257
        %vm1265 = vmor %vm1263, %vm1264
        %v1266 = vsel %vm1265, %v1257, %v1262
        %v1267 = vmul.f32 %v1235, %v1256
        %v1268 = vmul.f32 %v1236, %v1266
        %v1269 = vperm.slane %v1227, 0
        %v1270 = vmul.f32 %v1267, %v1269
        %v1271 = vmul.f32 %v1268, %v1269
        %v1272 = vperm.slane %v1228, 0
        %v1273 = vadd.f32 %v1270, %v1272
        %v1274 = vadd.f32 %v1271, %v1272
        %v1275 = vld [vmem:[%s434] sm:$0xff]
        %v1276 = vld [vmem:[%s434 + $0x8] sm:$0xff]
        %v1277 = vld [vmem:[%s434 + $0x10] sm:$0xff]
        %v1278 = vld [vmem:[%s434 + $0x18] sm:$0xff]
        %v1279 = vld [vmem:[%s434 + $0x20] sm:$0xff]
        %v1280 = vld [vmem:[%s434 + $0x28] sm:$0xff]
        %v1281 = vld [vmem:[%s434 + $0x30] sm:$0xff]
        %v1282 = vld [vmem:[%s434 + $0x38] sm:$0xff]
        %v1283 = vld [vmem:[%s434 + $0x40] sm:$0xff]
        %v1284 = vld [vmem:[%s434 + $0x48] sm:$0xff]
        %v1285 = vld [vmem:[%s434 + $0x50] sm:$0xff]
        %v1286 = vld [vmem:[%s434 + $0x58] sm:$0xff]
        %v1287 = vld [vmem:[%s434 + $0x60] sm:$0xff]
        %v1288 = vld [vmem:[%s434 + $0x68] sm:$0xff]
        %v1289 = vld [vmem:[%s434 + $0x70] sm:$0xff]
        %v1290 = vld [vmem:[%s434 + $0x78] sm:$0xff]
        %v1291 = vld [vmem:[%s434 + $0x80] sm:$0xff]
        %v1292 = vld [vmem:[%s434 + $0x88] sm:$0xff]
        %v1293 = vld [vmem:[%s434 + $0x90] sm:$0xff]
        %v1294 = vld [vmem:[%s434 + $0x98] sm:$0xff]
        %v1295 = vld [vmem:[%s434 + $0xa0] sm:$0xff]
        %v1296 = vld [vmem:[%s434 + $0xa8] sm:$0xff]
        %v1297 = vld [vmem:[%s434 + $0xb0] sm:$0xff]
        %v1298 = vld [vmem:[%s434 + $0xb8] sm:$0xff]
        %v1299 = vld [vmem:[%s434 + $0xc0] sm:$0xff]
        %v1300 = vld [vmem:[%s434 + $0xc8] sm:$0xff]
        %v1301 = vld [vmem:[%s434 + $0xd0] sm:$0xff]
        %v1302 = vld [vmem:[%s434 + $0xd8] sm:$0xff]
        %v1303 = vld [vmem:[%s434 + $0xe0] sm:$0xff]
        %v1304 = vld [vmem:[%s434 + $0xe8] sm:$0xff]
        %v1305 = vld [vmem:[%s434 + $0xf0] sm:$0xff]
        %v1306 = vld [vmem:[%s434 + $0xf8] sm:$0xff]
        %v1307 = vld [vmem:[%s513] sm:$0x3]
        %v1309 = vperm.slane %v1307, 0
        %v1310 = vperm.slane %v1307, 1
        %1313 = vmatpush.msra.mxu0 %v1305
        %1314 = vmatpush.msra.mxu0 %v1303
        %1315 = vmatpush.msra.mxu0 %v1301
        %1316 = vmatpush.msra.mxu0 %v1299
        %1317 = vmatpush.msra.mxu0 %v1297
        %1318 = vmatpush.msra.mxu0 %v1295
        %1319 = vmatpush.msra.mxu0 %v1293
        %1320 = vmatpush.msra.mxu0 %v1291
        %1321 = vmatpush.msra.mxu0 %v1289
        %1322 = vmatpush.msra.mxu0 %v1287
        %1323 = vmatpush.msra.mxu0 %v1285
        %1324 = vmatpush.msra.mxu0 %v1283
        %1325 = vmatpush.msra.mxu0 %v1281
        %1326 = vmatpush.msra.mxu0 %v1279
        %1327 = vmatpush.msra.mxu0 %v1277
        %1328 = vmatpush.msra.mxu0 %v1275
        %1329 = vmatmul.f32.gmra.mxu0 %v1273
        %v1330 = vpop.f32.mrf.mxu0
        %v1331 = vadd.f32 %v1309, %v1330
        %1332 = vmatmul.f32.gmra.mxu0 %v1274
        %v1333 = vpop.f32.mrf.mxu0
        %v1334 = vadd.f32 %v1309, %v1333
        %1335 = vdwg.mxu0
        %1336 = vmatpush.msra.mxu0 %v1306
        %1337 = vmatpush.msra.mxu0 %v1304
        %1338 = vmatpush.msra.mxu0 %v1302
        %1339 = vmatpush.msra.mxu0 %v1300
        %1340 = vmatpush.msra.mxu0 %v1298
        %1341 = vmatpush.msra.mxu0 %v1296
        %1342 = vmatpush.msra.mxu0 %v1294
        %1343 = vmatpush.msra.mxu0 %v1292
        %1344 = vmatpush.msra.mxu0 %v1290
        %1345 = vmatpush.msra.mxu0 %v1288
        %1346 = vmatpush.msra.mxu0 %v1286
        %1347 = vmatpush.msra.mxu0 %v1284
        %1348 = vmatpush.msra.mxu0 %v1282
        %1349 = vmatpush.msra.mxu0 %v1280
        %1350 = vmatpush.msra.mxu0 %v1278
        %1351 = vmatpush.msra.mxu0 %v1276
        %1352 = vmatmul.f32.gmra.mxu0 %v1273
        %v1353 = vpop.f32.mrf.mxu0
        %v1354 = vadd.f32 %v1310, %v1353
        %1355 = vmatmul.f32.gmra.mxu0 %v1274
        %v1356 = vpop.f32.mrf.mxu0
        %v1357 = vadd.f32 %v1310, %v1356
        %1358 = vdwg.mxu0
        %v1359 = vmul.f32 %v1331, %v1331
        %v1360 = vmul.f32 %v1354, %v1354
        %v1361 = vmul.f32 %v1334, %v1334
        %v1362 = vmul.f32 %v1357, %v1357
        %v1363 = vmul.f32 %v1331, %v1359
        %v1364 = vmul.f32 %v1354, %v1360
        %v1365 = vmul.f32 %v1334, %v1361
        %v1366 = vmul.f32 %v1357, %v1362
        %v1367 = vmul.f32 %v1363, 0.044715
        %v1368 = vmul.f32 %v1364, 0.044715
        %v1369 = vmul.f32 %v1365, 0.044715
        %v1370 = vmul.f32 %v1366, 0.044715
        %v1371 = vadd.f32 %v1331, %v1367
        %v1372 = vadd.f32 %v1354, %v1368
        %v1373 = vadd.f32 %v1334, %v1369
        %v1374 = vadd.f32 %v1357, %v1370
        %v1375 = vmul.f32 %v1371, 0.7978846
        %v1376 = vmul.f32 %v1372, 0.7978846
        %v1377 = vmul.f32 %v1373, 0.7978846
        %v1378 = vmul.f32 %v1374, 0.7978846
        %v1379 = vtanh.pop %v1375
        %v1380 = vtanh.pop %v1376
        %v1381 = vtanh.pop %v1377
        %v1382 = vtanh.pop %v1378
        %v1383 = vadd.f32 %v1379, 1.0
        %v1384 = vadd.f32 %v1380, 1.0
        %v1385 = vadd.f32 %v1381, 1.0
        %v1386 = vadd.f32 %v1382, 1.0
        %v1387 = vmul.f32 %v1383, 0.5
        %v1388 = vmul.f32 %v1384, 0.5
        %v1389 = vmul.f32 %v1385, 0.5
        %v1390 = vmul.f32 %v1386, 0.5
        %v1391 = vmul.f32 %v1331, %v1387
        %v1392 = vmul.f32 %v1354, %v1388
        %v1393 = vmul.f32 %v1334, %v1389
        %v1394 = vmul.f32 %v1357, %v1390
        %v1395 = vld [vmem:[%s444] sm:$0xff]
        %v1396 = vld [vmem:[%s444 + $0x8] sm:$0xff]
        %v1397 = vld [vmem:[%s444 + $0x10] sm:$0xff]
        %v1398 = vld [vmem:[%s444 + $0x18] sm:$0xff]
        %v1399 = vld [vmem:[%s444 + $0x20] sm:$0xff]
        %v1400 = vld [vmem:[%s444 + $0x28] sm:$0xff]
        %v1401 = vld [vmem:[%s444 + $0x30] sm:$0xff]
        %v1402 = vld [vmem:[%s444 + $0x38] sm:$0xff]
        %v1403 = vld [vmem:[%s444 + $0x40] sm:$0xff]
        %v1404 = vld [vmem:[%s444 + $0x48] sm:$0xff]
        %v1405 = vld [vmem:[%s444 + $0x50] sm:$0xff]
        %v1406 = vld [vmem:[%s444 + $0x58] sm:$0xff]
        %v1407 = vld [vmem:[%s444 + $0x60] sm:$0xff]
        %v1408 = vld [vmem:[%s444 + $0x68] sm:$0xff]
        %v1409 = vld [vmem:[%s444 + $0x70] sm:$0xff]
        %v1410 = vld [vmem:[%s444 + $0x78] sm:$0xff]
        %v1411 = vld [vmem:[%s444 + $0x80] sm:$0xff]
        %v1412 = vld [vmem:[%s444 + $0x88] sm:$0xff]
        %v1413 = vld [vmem:[%s444 + $0x90] sm:$0xff]
        %v1414 = vld [vmem:[%s444 + $0x98] sm:$0xff]
        %v1415 = vld [vmem:[%s444 + $0xa0] sm:$0xff]
        %v1416 = vld [vmem:[%s444 + $0xa8] sm:$0xff]
        %v1417 = vld [vmem:[%s444 + $0xb0] sm:$0xff]
        %v1418 = vld [vmem:[%s444 + $0xb8] sm:$0xff]
        %v1419 = vld [vmem:[%s444 + $0xc0] sm:$0xff]
        %v1420 = vld [vmem:[%s444 + $0xc8] sm:$0xff]
        %v1421 = vld [vmem:[%s444 + $0xd0] sm:$0xff]
        %v1422 = vld [vmem:[%s444 + $0xd8] sm:$0xff]
        %v1423 = vld [vmem:[%s444 + $0xe0] sm:$0xff]
        %v1424 = vld [vmem:[%s444 + $0xe8] sm:$0xff]
        %v1425 = vld [vmem:[%s444 + $0xf0] sm:$0xff]
        %v1426 = vld [vmem:[%s444 + $0xf8] sm:$0xff]
        %1427 = vmatpush.msra.mxu0 %v1410
        %1428 = vmatpush.msra.mxu0 %v1409
        %1429 = vmatpush.msra.mxu0 %v1408
        %1430 = vmatpush.msra.mxu0 %v1407
        %1431 = vmatpush.msra.mxu0 %v1406
        %1432 = vmatpush.msra.mxu0 %v1405
        %1433 = vmatpush.msra.mxu0 %v1404
        %1434 = vmatpush.msra.mxu0 %v1403
        %1435 = vmatpush.msra.mxu0 %v1402
        %1436 = vmatpush.msra.mxu0 %v1401
        %1437 = vmatpush.msra.mxu0 %v1400
        %1438 = vmatpush.msra.mxu0 %v1399
        %1439 = vmatpush.msra.mxu0 %v1398
        %1440 = vmatpush.msra.mxu0 %v1397
        %1441 = vmatpush.msra.mxu0 %v1396
        %1442 = vmatpush.msra.mxu0 %v1395
        %1443 = vmatmul.f32.gmra.mxu0 %v1391
        %v1444 = vpop.f32.mrf.mxu0
        %v1445 = vadd.f32 0.0, %v1444
        %1446 = vmatmul.f32.gmra.mxu0 %v1393
        %v1447 = vpop.f32.mrf.mxu0
        %v1448 = vadd.f32 0.0, %v1447
        %1449 = vdwg.mxu0
        %1450 = vmatpush.msra.mxu0 %v1426
        %1451 = vmatpush.msra.mxu0 %v1425
        %1452 = vmatpush.msra.mxu0 %v1424
        %1453 = vmatpush.msra.mxu0 %v1423
        %1454 = vmatpush.msra.mxu0 %v1422
        %1455 = vmatpush.msra.mxu0 %v1421
        %1456 = vmatpush.msra.mxu0 %v1420
        %1457 = vmatpush.msra.mxu0 %v1419
        %1458 = vmatpush.msra.mxu0 %v1418
        %1459 = vmatpush.msra.mxu0 %v1417
        %1460 = vmatpush.msra.mxu0 %v1416
        %1461 = vmatpush.msra.mxu0 %v1415
        %1462 = vmatpush.msra.mxu0 %v1414
        %1463 = vmatpush.msra.mxu0 %v1413
        %1464 = vmatpush.msra.mxu0 %v1412
        %1465 = vmatpush.msra.mxu0 %v1411
        %1466 = vmatmul.f32.gmra.mxu0 %v1392
        %v1467 = vpop.f32.mrf.mxu0
        %v1468 = vadd.f32 %v1445, %v1467
        %1469 = vmatmul.f32.gmra.mxu0 %v1394
        %v1470 = vpop.f32.mrf.mxu0
        %v1471 = vadd.f32 %v1448, %v1470
        %1472 = vdwg.mxu0
        %v1473 = vadd.f32 %v1225, %v1468
        %v1474 = vadd.f32 %v1226, %v1471
        %v1475 = vld [vmem:[%s505 + $0x5] sm:$0x1]
        %v1476 = vperm.slane %v1475, 0
        %v1477 = vadd.f32 %v1473, %v1476
        %v1478 = vadd.f32 %v1474, %v1476
        %1479 = vst [vmem:[#allocation2] sm:$0xff] %v1477
        %1480 = vst [vmem:[#allocation2 + $0x8] sm:$0xff] %v1478
        %p1481 = scmp.eq.s32.totalorder %s29, 2
        // Predicated region
        $region77: #{esm_embedder_forward.1} parent=55 // pred_check
          %p1482 = pneg %p1481
        $region78: #{esm_embedder_forward.1} parent=55 // pred_check_branch
          %1484 = sbr.rel (%p1482) target = $region80
        $region79: #{esm_embedder_forward.1} parent=55 // pred_region
          %v1485 = vld [vmem:[%s1 + $0x2] sm:$0x1]
          %v1486 = vld [vmem:[%s1 + $0x3] sm:$0x1]
          %1487 = vadd.xlane.f32.xlu0 %v1477
          %v1488 = vpop.xlane.xlu0 %1487
          %1489 = vadd.xlane.f32.xlu0 %v1478
          %v1490 = vpop.xlane.xlu0 %1489
          %v1491 = vmul.f32 %v1488, %v591
          %v1492 = vmul.f32 %v1490, %v591
          %v1493 = vsub.f32 %v1477, %v1491
          %v1494 = vsub.f32 %v1478, %v1492
          %v1495 = vmul.f32 %v1493, %v1493
          %v1496 = vmul.f32 %v1494, %v1494
          %1497 = vadd.xlane.f32.xlu0 %v1495
          %v1498 = vpop.xlane.xlu0 %1497
          %1499 = vadd.xlane.f32.xlu0 %v1496
          %v1500 = vpop.xlane.xlu0 %1499
          %v1501 = vmul.f32 %v1498, %v591
          %v1502 = vmul.f32 %v1500, %v591
          %v1503 = vadd.f32 %v1501, 1e-05
          %v1504 = vadd.f32 %v1502, 1e-05
          %v1505 = vrsqrt.pop %v1503
          %v1506 = vmul.f32 %v1505, %v1503
          %v1507 = vmul.f32 %v1506, %v1505
          %v1508 = vmul.f32 0.5, %v1507
          %v1509 = vsub.f32 1.5, %v1508
          %v1510 = vmul.f32 %v1505, %v1509
          %vm1511 = vweird.f32 %v1503
          %vm1512 = vweird.f32 %v1505
          %vm1513 = vmor %vm1511, %vm1512
          %v1514 = vsel %vm1513, %v1505, %v1510
          %v1515 = vrsqrt.pop %v1504
          %v1516 = vmul.f32 %v1515, %v1504
          %v1517 = vmul.f32 %v1516, %v1515
          %v1518 = vmul.f32 0.5, %v1517
          %v1519 = vsub.f32 1.5, %v1518
          %v1520 = vmul.f32 %v1515, %v1519
          %vm1521 = vweird.f32 %v1504
          %vm1522 = vweird.f32 %v1515
          %vm1523 = vmor %vm1521, %vm1522
          %v1524 = vsel %vm1523, %v1515, %v1520
          %v1525 = vmul.f32 %v1493, %v1514
          %v1526 = vmul.f32 %v1494, %v1524
          %v1527 = vperm.slane %v1485, 0
          %v1528 = vmul.f32 %v1525, %v1527
          %v1529 = vmul.f32 %v1526, %v1527
          %v1530 = vperm.slane %v1486, 0
          %v1531 = vadd.f32 %v1528, %v1530
          %v1532 = vadd.f32 %v1529, %v1530
          %1533 = vst [vmem:[%s9] sm:$0xff] %v1531
          %1534 = vst [vmem:[%s9 + $0x8] sm:$0xff] %v1532
        $region80: #{esm_embedder_forward.1} parent=55 // pred_fallthru
          _
        // Predicated region
        $region81: #{esm_embedder_forward.1} parent=55 // pred_check
          %p1535 = pneg %p266
        $region82: #{esm_embedder_forward.1} parent=55 // pred_check_branch
          %1537 = sbr.rel (%p1535) target = $region84
        $region83: #{esm_embedder_forward.1} parent=55 // pred_region
          _
        $region84: #{esm_embedder_forward.1} parent=55 // pred_fallthru
          _
        // Predicated region
        $region85: #{esm_embedder_forward.1} parent=55 // pred_check
          %p1538 = pneg %p266
        $region86: #{esm_embedder_forward.1} parent=55 // pred_check_branch
          %1540 = sbr.rel (%p1538) target = $region88
        $region87: #{esm_embedder_forward.1} parent=55 // pred_region
          _
        $region88: #{esm_embedder_forward.1} parent=55 // pred_fallthru
          _
      $region56: #{esm_embedder_forward.1} parent=5 // pred_fallthru
        _
      %p1541 = scmp.le.s32.totalorder 2, %s24
      // Predicated region
      $region89: #{esm_embedder_forward.1} parent=5 // pred_check
        %p1542 = pneg %p1541
      $region90: #{esm_embedder_forward.1} parent=5 // pred_check_branch
        %1544 = sbr.rel (%p1542) target = $region92
      $region91: #{esm_embedder_forward.1} parent=5 // pred_region
        %s1545 = ssub.s32 %s24, 2
      $region92: #{esm_embedder_forward.1} parent=5 // pred_fallthru
        _
    $region6: #{esm_embedder_forward.1} parent=1 // loop_footer
      %s28 = sadd.s32 1, %s24
    $region7: #{esm_embedder_forward.1} parent=1 // loop_footer_branch
      %23 = sbr.rel target = $region3
    $region8: #{esm_embedder_forward.1} parent=1 // loop_exit
      _
    %1546 = vsyncpa [#allocation4], 1
    %s1547 = scalar_lea.sflag [#allocation4], 1
    %1548 = vsyncpa %s1547, 1
    %1549 = vsyncpa [#allocation6], 1
    %s1550 = scalar_lea.sflag [#allocation6], 1
    %1551 = vsyncpa %s1550, 1
    %1552 = vsyncpa [#allocation9], 1
    %s1553 = scalar_lea.sflag [#allocation9], 1
    %1554 = vsyncpa %s1553, 1

</llo_original>
